<compile_context>
chip_gen: v7x
topology: tpu7x:2x2x1
jax: 0.10.0
libtpu: 0.0.40
codegen_flags: <defaults>
</compile_context>

<pallas_src>
import functools
import math

import jax
import jax.numpy as jnp
from jax.experimental import pallas as pl
from jax.experimental.pallas import tpu as pltpu


# ----------------------------------------------------------------------------
# In-kernel helpers
# ----------------------------------------------------------------------------
def _layer_norm(x, gamma, beta, eps=1e-5):
    # torch.nn.LayerNorm over the last dim, biased variance, eps=1e-5.
    mean = jnp.mean(x, axis=-1, keepdims=True)
    var = jnp.mean((x - mean) ** 2, axis=-1, keepdims=True)
    return (x - mean) * jax.lax.rsqrt(var + eps) * gamma + beta


# Abramowitz & Stegun 7.1.26 rational approximation of erf (max abs err 1.5e-7)
# -> avoids relying on a lax.erf lowering inside Mosaic while keeping the
#    exact-GELU semantics of torch.nn.GELU(approximate='none').
_A1, _A2, _A3, _A4, _A5 = 0.254829592, -0.284496736, 1.421413741, -1.453152027, 1.061405429
_PP = 0.3275911


def _erf_approx(x):
    ax = jnp.abs(x)
    t = 1.0 / (1.0 + _PP * ax)
    poly = ((((_A5 * t + _A4) * t + _A3) * t + _A2) * t + _A1) * t
    y = 1.0 - poly * jnp.exp(-ax * ax)
    return jnp.where(x >= 0, y, -y)


def _gelu_exact(x):
    # 0.5 * x * (1 + erf(x / sqrt(2)))
    return 0.5 * x * (1.0 + _erf_approx(x * (1.0 / math.sqrt(2.0))))


def _softmax_last(x):
    m = jnp.max(x, axis=-1, keepdims=True)
    e = jnp.exp(x - m)
    return e * pl.reciprocal(jnp.sum(e, axis=-1, keepdims=True), approx=True)


# ----------------------------------------------------------------------------
# Kernels
# ----------------------------------------------------------------------------
def _decoder_layer_kernel(
    x_ref, mask_ref,
    wqkv_ref, bqkv_ref, wo_ref, bo_ref,
    ln1_g_ref, ln1_b_ref,
    w1_ref, b1_ref, w2_ref, b2_ref,
    ln2_g_ref, ln2_b_ref,
    out_ref,
    *, n_heads,
):
    # One batch element per grid step: x (T, D) f32, mask (1, T) f32.
    x = x_ref[0]                                      # (T, D) f32 residual path
    T, D = x.shape
    H = n_heads
    dh = D // H

    xb = x.astype(jnp.bfloat16)

    # --- MultiHeadedAttentionFast (fused QKV projection, bf16 on the MXU) ---
    qkv = jnp.dot(xb, wqkv_ref[...], preferred_element_type=jnp.float32)
    qkv = qkv + bqkv_ref[...]                         # (T, 3D) f32

    q = jnp.swapaxes(qkv[:, 0 * D:1 * D].reshape(T, H, dh), 0, 1).astype(jnp.bfloat16)
    k = jnp.swapaxes(qkv[:, 1 * D:2 * D].reshape(T, H, dh), 0, 1).astype(jnp.bfloat16)
    v = jnp.swapaxes(qkv[:, 2 * D:3 * D].reshape(T, H, dh), 0, 1).astype(jnp.bfloat16)

    # batched (head-leading) attention scores: (H, T, T)
    s = jnp.einsum("hqd,hkd->hqk", q, k, preferred_element_type=jnp.float32)
    s = s * (1.0 / math.sqrt(dh))

    # causal + padding mask built in-kernel (no (T, T) mask streamed from HBM)
    row = jax.lax.broadcasted_iota(jnp.int32, (T, T), 0)
    col = jax.lax.broadcasted_iota(jnp.int32, (T, T), 1)
    keep = (col <= row) & (mask_ref[0] > 0.5)          # (T, T)
    s = jnp.where(keep[None, :, :], s, -10000.0)       # masked_fill(mask==False)

    p = _softmax_last(s)                               # (H, T, T) f32
    att = jnp.einsum("hqk,hkd->hqd", p.astype(jnp.bfloat16), v,
                     preferred_element_type=jnp.float32)     # (H, T, dh)
    att = jnp.swapaxes(att, 0, 1).reshape(T, D)              # (T, D) == concat(heads)

    mha = jnp.dot(att.astype(jnp.bfloat16), wo_ref[...],
                  preferred_element_type=jnp.float32) + bo_ref[...]

    # --- SkipNorm(mha): norm(x + mha), dropout = identity ---
    h1 = _layer_norm(x + mha, ln1_g_ref[...], ln1_b_ref[...])

    # --- FeedForward: Linear -> GELU -> Linear (dropout = identity) ---
    f = jnp.dot(h1.astype(jnp.bfloat16), w1_ref[...],
                preferred_element_type=jnp.float32) + b1_ref[...]
    f = _gelu_exact(f)
    f = jnp.dot(f.astype(jnp.bfloat16), w2_ref[...],
                preferred_element_type=jnp.float32) + b2_ref[...]

    # --- SkipNorm(ff) ---
    out_ref[0] = _layer_norm(h1 + f, ln2_g_ref[...], ln2_b_ref[...])


def _vocab_proj_kernel(d_ref, e_ref, out_ref):
    # out(tv, T) = E_tile(tv, D) @ d(T, D)^T  -- contraction on D, no transpose
    # materialized; output is written directly in (B, V, T) layout.
    d = d_ref[0].astype(jnp.bfloat16)                  # (T, D)
    e = e_ref[...]                                     # (tv, D) bf16
    out_ref[0] = jax.lax.dot_general(
        e, d, (((1,), (1,)), ((), ())), preferred_element_type=jnp.float32)


# ----------------------------------------------------------------------------
# Wrappers around pallas_call
# ----------------------------------------------------------------------------
_VMEM_LIMIT = 64 * 1024 * 1024  # explicit VMEM budget (fits all TPU generations)


def _full_spec(shape):
    n = len(shape)
    return pl.BlockSpec(shape, lambda *_: (0,) * n)


def decoder_layer(x, mask_f, p, n_heads):
    B, T, D = x.shape
    F = p["w1"].shape[1]
    kernel = functools.partial(_decoder_layer_kernel, n_heads=n_heads)
    in_specs = [
        pl.BlockSpec((1, T, D), lambda b: (b, 0, 0)),    # x
        pl.BlockSpec((1, 1, T), lambda b: (b, 0, 0)),    # padding mask row
        _full_spec((D, 3 * D)), _full_spec((1, 3 * D)),  # Wqkv, bqkv
        _full_spec((D, D)), _full_spec((1, D)),          # Wo, bo
        _full_spec((1, D)), _full_spec((1, D)),          # LN1 gamma, beta
        _full_spec((D, F)), _full_spec((1, F)),          # FF W1, b1
        _full_spec((F, D)), _full_spec((1, D)),          # FF W2, b2
        _full_spec((1, D)), _full_spec((1, D)),          # LN2 gamma, beta
    ]
    return pl.pallas_call(
        kernel,
        out_shape=jax.ShapeDtypeStruct((B, T, D), jnp.float32),
        grid=(B,),
        in_specs=in_specs,
        out_specs=pl.BlockSpec((1, T, D), lambda b: (b, 0, 0)),
        compiler_params=pltpu.CompilerParams(
            dimension_semantics=("parallel",),
            vmem_limit_bytes=_VMEM_LIMIT),
    )(
        x, mask_f,
        p["wqkv"], p["bqkv"], p["wo"], p["bo"],
        p["ln1_g"], p["ln1_b"],
        p["w1"], p["b1"], p["w2"], p["b2"],
        p["ln2_g"], p["ln2_b"],
    )


def _pick_vocab_tile(V, target=2048):
    if V <= target:
        return V
    t = target - (target % 8)
    while t >= 8:
        if V % t == 0:
            return t
        t -= 8
    return V


def vocab_projection(d, embed):
    # d: (B, T, D) f32, embed: (V, D) bf16  ->  (B, V, T) f32
    B, T, D = d.shape
    V = embed.shape[0]
    tv = _pick_vocab_tile(V)
    return pl.pallas_call(
        _vocab_proj_kernel,
        out_shape=jax.ShapeDtypeStruct((B, V, T), jnp.float32),
        grid=(B, V // tv),
        in_specs=[
            pl.BlockSpec((1, T, D), lambda b, j: (b, 0, 0)),
            pl.BlockSpec((tv, D), lambda b, j: (j, 0)),
        ],
        out_specs=pl.BlockSpec((1, tv, T), lambda b, j: (b, j, 0)),
        compiler_params=pltpu.CompilerParams(
            dimension_semantics=("parallel", "parallel"),
            vmem_limit_bytes=_VMEM_LIMIT),
    )(d, embed)


# ----------------------------------------------------------------------------
# Full model forward (Pallas-backed)
# ----------------------------------------------------------------------------
def gpt1_pretrain_forward(params, tokens, input_mask, n_heads):
    E = params["embed"]                                    # (V, D) bf16
    # Embedding gather + positional add left in plain JAX so XLA fuses them
    # (the previous standalone add_pos kernel was a pure extra HBM pass).
    x = jnp.take(E, tokens, axis=0).astype(jnp.float32) + params["pos"]
    mask_f = input_mask.astype(jnp.float32)[:, None, :]    # (B, 1, T)

    for lp in params["layers"]:
        x = decoder_layer(x, mask_f, lp, n_heads)

    return vocab_projection(x, E)                          # (B, V, T) directly


# ----------------------------------------------------------------------------
# Pure-JAX reference (fp32) for correctness check
# ----------------------------------------------------------------------------
def _ref_forward(params, tokens, input_mask, n_heads):
    f32 = lambda a: jnp.asarray(a, jnp.float32)
    E = f32(params["embed"])
    x = jnp.take(E, tokens, axis=0) + params["pos"]
    B, T, D = x.shape
    H = n_heads
    dh = D // H
    tril = jnp.tril(jnp.ones((T, T), dtype=bool))
    mask = input_mask[:, None, :] & tril[None, :, :]        # (B, T, T)

    def ln(y, g, b, eps=1e-5):
        m = jnp.mean(y, -1, keepdims=True)
        v = jnp.mean((y - m) ** 2, -1, keepdims=True)
        return (y - m) / jnp.sqrt(v + eps) * g + b

    for p in params["layers"]:
        qkv = x @ f32(p["wqkv"]) + p["bqkv"]
        q, k, v = jnp.split(qkv, 3, axis=-1)
        q = q.reshape(B, T, H, dh).transpose(0, 2, 1, 3)
        k = k.reshape(B, T, H, dh).transpose(0, 2, 1, 3)
        v = v.reshape(B, T, H, dh).transpose(0, 2, 1, 3)
        s = jnp.einsum("bhqd,bhkd->bhqk", q, k) / math.sqrt(dh)
        s = jnp.where(mask[:, None, :, :], s, -10000.0)
        pr = jax.nn.softmax(s, axis=-1)
        att = jnp.einsum("bhqk,bhkd->bhqd", pr, v)
        att = att.transpose(0, 2, 1, 3).reshape(B, T, D)
        mha = att @ f32(p["wo"]) + p["bo"]
        h1 = ln(x + mha, p["ln1_g"], p["ln1_b"])
        f = h1 @ f32(p["w1"]) + p["b1"]
        f = 0.5 * f * (1.0 + jax.scipy.special.erf(f / math.sqrt(2.0)))
        f = f @ f32(p["w2"]) + p["b2"]
        x = ln(h1 + f, p["ln2_g"], p["ln2_b"])
    return jnp.einsum("btd,vd->bvt", x, E)                  # (B, V, T)


# ----------------------------------------------------------------------------
# Deterministic parameter init (shapes from the torch module __init__)
# ----------------------------------------------------------------------------
def init_params(key, n_vocab, n_tokens, dim_embed, n_layers, dim_ff=3072):
    def nrm(shape, dtype, scale=0.02):
        nonlocal key
        key, sub = jax.random.split(key)
        return (scale * jax.random.normal(sub, shape, dtype=jnp.float32)).astype(dtype)

    bf16, f32 = jnp.bfloat16, jnp.float32
    D = dim_embed
    params = {
        "embed": nrm((n_vocab, D), bf16),
        # torch module zero-initializes the positional parameter
        "pos": jnp.zeros((1, n_tokens, D), f32),
        "layers": [],
    }
    for _ in range(n_layers):
        params["layers"].append({
            # fused W_queries / W_keys / W_values
            "wqkv": nrm((D, 3 * D), bf16), "bqkv": nrm((1, 3 * D), f32),
            "wo": nrm((D, D), bf16), "bo": nrm((1, D), f32),
            "ln1_g": jnp.ones((1, D), f32), "ln1_b": jnp.zeros((1, D), f32),
            "w1": nrm((D, dim_ff), bf16), "b1": nrm((1, dim_ff), f32),
            "w2": nrm((dim_ff, D), bf16), "b2": nrm((1, D), f32),
            "ln2_g": jnp.ones((1, D), f32), "ln2_b": jnp.zeros((1, D), f32),
        })
    return params


# ----------------------------------------------------------------------------
if __name__ == "__main__":
    # Small config consistent with the module: GPT1Pretrain(
    #   n_vocab=64, n_tokens=8, dim_embed=32, n_decoder_layers=2, n_heads=4)
    B, T, V, D, L, H = 2, 8, 64, 32, 2, 4
    FF = 4 * D

    key = jax.random.PRNGKey(0)
    pkey, tkey = jax.random.split(key)
    params = init_params(pkey, n_vocab=V, n_tokens=T, dim_embed=D,
                         n_layers=L, dim_ff=FF)

    tokens = jax.random.randint(tkey, (B, T), 0, V, dtype=jnp.int32)
    # second batch element has 3 padded tokens at the end
    lengths = jnp.array([T, T - 3])
    input_mask = jnp.arange(T)[None, :] < lengths[:, None]       # (B, T) bool

    out = gpt1_pretrain_forward(params, tokens, input_mask, n_heads=H)
    out = jax.block_until_ready(out)
    assert out.shape == (B, V, T), out.shape

    ref = _ref_forward(params, tokens, input_mask, n_heads=H)
    assert jnp.all(jnp.isfinite(out))
    # bf16 matmul operands + approx softmax reciprocal -> slightly looser tol
    assert jnp.allclose(out, ref, atol=2e-2, rtol=2e-2), \
        float(jnp.max(jnp.abs(out - ref)))

    print("KERNEL_OK")
</pallas_src>

<mosaic_0001>
module attributes {stable_mosaic.version = 11 : i64} {
  func.func @_decoder_layer_kernel(%arg0: i32, %arg1: memref<1x8x32xf32, #tpu.memory_space<vmem>>, %arg2: memref<1x1x8xf32, #tpu.memory_space<vmem>>, %arg3: memref<32x96xbf16, #tpu.memory_space<vmem>>, %arg4: memref<1x96xf32, #tpu.memory_space<vmem>>, %arg5: memref<32x32xbf16, #tpu.memory_space<vmem>>, %arg6: memref<1x32xf32, #tpu.memory_space<vmem>>, %arg7: memref<1x32xf32, #tpu.memory_space<vmem>>, %arg8: memref<1x32xf32, #tpu.memory_space<vmem>>, %arg9: memref<32x128xbf16, #tpu.memory_space<vmem>>, %arg10: memref<1x128xf32, #tpu.memory_space<vmem>>, %arg11: memref<128x32xbf16, #tpu.memory_space<vmem>>, %arg12: memref<1x32xf32, #tpu.memory_space<vmem>>, %arg13: memref<1x32xf32, #tpu.memory_space<vmem>>, %arg14: memref<1x32xf32, #tpu.memory_space<vmem>>, %arg15: memref<1x8x32xf32, #tpu.memory_space<vmem>>) attributes {dimension_semantics = [#tpu.dimension_semantics<parallel>], iteration_bounds = array<i64: 2>, scalar_prefetch = 0 : i64, scratch_operands = 0 : i64, tpu.core_type = #tpu.core_type<tc>, window_params = [{transform_indices = @transform_0, window_bounds = array<i64: 1, 8, 32>}, {transform_indices = @transform_1, window_bounds = array<i64: 1, 1, 8>}, {pipeline_mode = #tpu.pipeline_mode<synchronous>, transform_indices = @transform_2, window_bounds = array<i64: 32, 96>}, {pipeline_mode = #tpu.pipeline_mode<synchronous>, transform_indices = @transform_3, window_bounds = array<i64: 1, 96>}, {pipeline_mode = #tpu.pipeline_mode<synchronous>, transform_indices = @transform_4, window_bounds = array<i64: 32, 32>}, {pipeline_mode = #tpu.pipeline_mode<synchronous>, transform_indices = @transform_5, window_bounds = array<i64: 1, 32>}, {pipeline_mode = #tpu.pipeline_mode<synchronous>, transform_indices = @transform_6, window_bounds = array<i64: 1, 32>}, {pipeline_mode = #tpu.pipeline_mode<synchronous>, transform_indices = @transform_7, window_bounds = array<i64: 1, 32>}, {pipeline_mode = #tpu.pipeline_mode<synchronous>, transform_indices = @transform_8, window_bounds = array<i64: 32, 128>}, {pipeline_mode = #tpu.pipeline_mode<synchronous>, transform_indices = @transform_9, window_bounds = array<i64: 1, 128>}, {pipeline_mode = #tpu.pipeline_mode<synchronous>, transform_indices = @transform_10, window_bounds = array<i64: 128, 32>}, {pipeline_mode = #tpu.pipeline_mode<synchronous>, transform_indices = @transform_11, window_bounds = array<i64: 1, 32>}, {pipeline_mode = #tpu.pipeline_mode<synchronous>, transform_indices = @transform_12, window_bounds = array<i64: 1, 32>}, {pipeline_mode = #tpu.pipeline_mode<synchronous>, transform_indices = @transform_13, window_bounds = array<i64: 1, 32>}, {transform_indices = @transform_14, window_bounds = array<i64: 1, 8, 32>}]} {
    %c0 = arith.constant 0 : index
    %c0_0 = arith.constant 0 : index
    %c0_1 = arith.constant 0 : index
    %0 = vector.load %arg1[%c0, %c0_0, %c0_1] : memref<1x8x32xf32, #tpu.memory_space<vmem>>, vector<1x8x32xf32>
    %1 = vector.shape_cast %0 : vector<1x8x32xf32> to vector<8x32xf32>
    %2 = arith.truncf %1 : vector<8x32xf32> to vector<8x32xbf16>
    %c0_2 = arith.constant 0 : index
    %c0_3 = arith.constant 0 : index
    %3 = vector.load %arg3[%c0_2, %c0_3] : memref<32x96xbf16, #tpu.memory_space<vmem>>, vector<32x96xbf16>
    %cst = arith.constant dense<0.000000e+00> : vector<8x96xf32>
    %4 = tpu.matmul %2, %3, %cst {dimension_numbers = #tpu.dot_dimension_numbers<[1], [0], [0], [1], [0, 0, 1, 1], [], []>} : vector<8x32xbf16>, vector<32x96xbf16>, vector<8x96xf32> -> vector<8x96xf32>
    %c0_4 = arith.constant 0 : index
    %c0_5 = arith.constant 0 : index
    %5 = vector.load %arg4[%c0_4, %c0_5] : memref<1x96xf32, #tpu.memory_space<vmem>>, vector<1x96xf32>
    %6 = vector.broadcast %5 : vector<1x96xf32> to vector<8x96xf32>
    %7 = arith.addf %4, %6 : vector<8x96xf32>
    %8 = vector.extract_strided_slice %7 {offsets = [0, 0], sizes = [8, 32], strides = [1, 1]} : vector<8x96xf32> to vector<8x32xf32>
    %9 = vector.shape_cast %8 : vector<8x32xf32> to vector<8x4x8xf32>
    %10 = tpu.transpose %9, [1, 0, 2] : vector<8x4x8xf32> -> vector<4x8x8xf32>
    %11 = arith.truncf %10 : vector<4x8x8xf32> to vector<4x8x8xbf16>
    %12 = vector.extract_strided_slice %7 {offsets = [0, 32], sizes = [8, 32], strides = [1, 1]} : vector<8x96xf32> to vector<8x32xf32>
    %13 = vector.shape_cast %12 : vector<8x32xf32> to vector<8x4x8xf32>
    %14 = tpu.transpose %13, [1, 0, 2] : vector<8x4x8xf32> -> vector<4x8x8xf32>
    %15 = arith.truncf %14 : vector<4x8x8xf32> to vector<4x8x8xbf16>
    %16 = vector.extract_strided_slice %7 {offsets = [0, 64], sizes = [8, 32], strides = [1, 1]} : vector<8x96xf32> to vector<8x32xf32>
    %17 = vector.shape_cast %16 : vector<8x32xf32> to vector<8x4x8xf32>
    %18 = tpu.transpose %17, [1, 0, 2] : vector<8x4x8xf32> -> vector<4x8x8xf32>
    %19 = arith.truncf %18 : vector<4x8x8xf32> to vector<4x8x8xbf16>
    "tpu.trace_start"() <{level = 10 : i32, message = "hqd,hkd->hqk"}> : () -> ()
    %cst_6 = arith.constant dense<0.000000e+00> : vector<4x8x8xf32>
    %20 = tpu.matmul %11, %15, %cst_6 {dimension_numbers = #tpu.dot_dimension_numbers<[2], [2], [1], [1], [0, 0, 0, 1, 1, 1], [0], [0]>} : vector<4x8x8xbf16>, vector<4x8x8xbf16>, vector<4x8x8xf32> -> vector<4x8x8xf32>
    "tpu.trace_stop"() : () -> ()
    %cst_7 = arith.constant 0.353553385 : f32
    %21 = vector.broadcast %cst_7 : f32 to vector<4x8x8xf32>
    %22 = arith.mulf %20, %21 : vector<4x8x8xf32>
    %23 = tpu.iota {dimensions = array<i32: 0>} : vector<8x8xi32>
    %24 = tpu.iota {dimensions = array<i32: 1>} : vector<8x8xi32>
    %25 = arith.cmpi sle, %24, %23 : vector<8x8xi32>
    %c0_8 = arith.constant 0 : index
    %c0_9 = arith.constant 0 : index
    %c0_10 = arith.constant 0 : index
    %26 = vector.load %arg2[%c0_8, %c0_9, %c0_10] : memref<1x1x8xf32, #tpu.memory_space<vmem>>, vector<1x1x8xf32>
    %27 = vector.shape_cast %26 : vector<1x1x8xf32> to vector<1x8xf32>
    %cst_11 = arith.constant 5.000000e-01 : f32
    %28 = vector.broadcast %cst_11 : f32 to vector<1x8xf32>
    %29 = arith.cmpf ogt, %27, %28 : vector<1x8xf32>
    %30 = vector.broadcast %29 : vector<1x8xi1> to vector<8x8xi1>
    %31 = arith.andi %25, %30 : vector<8x8xi1>
    %32 = vector.shape_cast %31 : vector<8x8xi1> to vector<1x8x8xi1>
    %cst_12 = arith.constant -1.000000e+04 : f32
    %33 = vector.shape_cast %32 : vector<1x8x8xi1> to vector<1x8x8xi1>
    %34 = vector.broadcast %33 : vector<1x8x8xi1> to vector<4x8x8xi1>
    %35 = vector.broadcast %cst_12 : f32 to vector<4x8x8xf32>
    %36 = arith.select %34, %22, %35 : vector<4x8x8xi1>, vector<4x8x8xf32>
    %cst_13 = arith.constant dense<0xFF800000> : vector<4x8xf32>
    %37 = vector.multi_reduction <maximumf>, %36, %cst_13 [2] : vector<4x8x8xf32> to vector<4x8xf32>
    %38 = vector.shape_cast %37 : vector<4x8xf32> to vector<4x8x1xf32>
    %39 = vector.broadcast %38 : vector<4x8x1xf32> to vector<4x8x8xf32>
    %40 = arith.subf %36, %39 : vector<4x8x8xf32>
    %41 = math.exp %40 : vector<4x8x8xf32>
    %cst_14 = arith.constant dense<0.000000e+00> : vector<4x8xf32>
    %42 = vector.multi_reduction <add>, %41, %cst_14 [2] : vector<4x8x8xf32> to vector<4x8xf32>
    %43 = vector.shape_cast %42 : vector<4x8xf32> to vector<4x8x1xf32>
    %44 = tpu.reciprocal %43 {approx = true} : vector<4x8x1xf32> -> vector<4x8x1xf32>
    %45 = vector.broadcast %44 : vector<4x8x1xf32> to vector<4x8x8xf32>
    %46 = arith.mulf %41, %45 : vector<4x8x8xf32>
    %47 = arith.truncf %46 : vector<4x8x8xf32> to vector<4x8x8xbf16>
    "tpu.trace_start"() <{level = 10 : i32, message = "hqk,hkd->hqd"}> : () -> ()
    %cst_15 = arith.constant dense<0.000000e+00> : vector<4x8x8xf32>
    %48 = tpu.matmul %47, %19, %cst_15 {dimension_numbers = #tpu.dot_dimension_numbers<[2], [1], [1], [2], [0, 0, 0, 1, 1, 2], [0], [0]>} : vector<4x8x8xbf16>, vector<4x8x8xbf16>, vector<4x8x8xf32> -> vector<4x8x8xf32>
    "tpu.trace_stop"() : () -> ()
    %49 = tpu.transpose %48, [1, 0, 2] : vector<4x8x8xf32> -> vector<8x4x8xf32>
    %50 = vector.shape_cast %49 : vector<8x4x8xf32> to vector<8x32xf32>
    %51 = arith.truncf %50 : vector<8x32xf32> to vector<8x32xbf16>
    %c0_16 = arith.constant 0 : index
    %c0_17 = arith.constant 0 : index
    %52 = vector.load %arg5[%c0_16, %c0_17] : memref<32x32xbf16, #tpu.memory_space<vmem>>, vector<32x32xbf16>
    %cst_18 = arith.constant dense<0.000000e+00> : vector<8x32xf32>
    %53 = tpu.matmul %51, %52, %cst_18 {dimension_numbers = #tpu.dot_dimension_numbers<[1], [0], [0], [1], [0, 0, 1, 1], [], []>} : vector<8x32xbf16>, vector<32x32xbf16>, vector<8x32xf32> -> vector<8x32xf32>
    %c0_19 = arith.constant 0 : index
    %c0_20 = arith.constant 0 : index
    %54 = vector.load %arg6[%c0_19, %c0_20] : memref<1x32xf32, #tpu.memory_space<vmem>>, vector<1x32xf32>
    %55 = vector.broadcast %54 : vector<1x32xf32> to vector<8x32xf32>
    %56 = arith.addf %53, %55 : vector<8x32xf32>
    %57 = arith.addf %1, %56 : vector<8x32xf32>
    %c0_21 = arith.constant 0 : index
    %c0_22 = arith.constant 0 : index
    %58 = vector.load %arg7[%c0_21, %c0_22] : memref<1x32xf32, #tpu.memory_space<vmem>>, vector<1x32xf32>
    %c0_23 = arith.constant 0 : index
    %c0_24 = arith.constant 0 : index
    %59 = vector.load %arg8[%c0_23, %c0_24] : memref<1x32xf32, #tpu.memory_space<vmem>>, vector<1x32xf32>
    %cst_25 = arith.constant dense<0.000000e+00> : vector<8xf32>
    %60 = vector.multi_reduction <add>, %57, %cst_25 [1] : vector<8x32xf32> to vector<8xf32>
    %61 = vector.shape_cast %60 : vector<8xf32> to vector<8x1xf32>
    %cst_26 = arith.constant 3.200000e+01 : f32
    %62 = vector.broadcast %cst_26 : f32 to vector<8x1xf32>
    %63 = arith.divf %61, %62 : vector<8x1xf32>
    %64 = vector.broadcast %63 : vector<8x1xf32> to vector<8x32xf32>
    %65 = arith.subf %57, %64 : vector<8x32xf32>
    %66 = arith.mulf %65, %65 : vector<8x32xf32>
    %cst_27 = arith.constant dense<0.000000e+00> : vector<8xf32>
    %67 = vector.multi_reduction <add>, %66, %cst_27 [1] : vector<8x32xf32> to vector<8xf32>
    %68 = vector.shape_cast %67 : vector<8xf32> to vector<8x1xf32>
    %cst_28 = arith.constant 3.200000e+01 : f32
    %69 = vector.broadcast %cst_28 : f32 to vector<8x1xf32>
    %70 = arith.divf %68, %69 : vector<8x1xf32>
    %71 = vector.broadcast %63 : vector<8x1xf32> to vector<8x32xf32>
    %72 = arith.subf %57, %71 : vector<8x32xf32>
    %cst_29 = arith.constant 9.99999974E-6 : f32
    %73 = vector.broadcast %cst_29 : f32 to vector<8x1xf32>
    %74 = arith.addf %70, %73 : vector<8x1xf32>
    %75 = math.rsqrt %74 : vector<8x1xf32>
    %76 = vector.broadcast %75 : vector<8x1xf32> to vector<8x32xf32>
    %77 = arith.mulf %72, %76 : vector<8x32xf32>
    %78 = vector.broadcast %58 : vector<1x32xf32> to vector<8x32xf32>
    %79 = arith.mulf %77, %78 : vector<8x32xf32>
    %80 = vector.broadcast %59 : vector<1x32xf32> to vector<8x32xf32>
    %81 = arith.addf %79, %80 : vector<8x32xf32>
    %82 = arith.truncf %81 : vector<8x32xf32> to vector<8x32xbf16>
    %c0_30 = arith.constant 0 : index
    %c0_31 = arith.constant 0 : index
    %83 = vector.load %arg9[%c0_30, %c0_31] : memref<32x128xbf16, #tpu.memory_space<vmem>>, vector<32x128xbf16>
    %cst_32 = arith.constant dense<0.000000e+00> : vector<8x128xf32>
    %84 = tpu.matmul %82, %83, %cst_32 {dimension_numbers = #tpu.dot_dimension_numbers<[1], [0], [0], [1], [0, 0, 1, 1], [], []>} : vector<8x32xbf16>, vector<32x128xbf16>, vector<8x128xf32> -> vector<8x128xf32>
    %c0_33 = arith.constant 0 : index
    %c0_34 = arith.constant 0 : index
    %85 = vector.load %arg10[%c0_33, %c0_34] : memref<1x128xf32, #tpu.memory_space<vmem>>, vector<1x128xf32>
    %86 = vector.broadcast %85 : vector<1x128xf32> to vector<8x128xf32>
    %87 = arith.addf %84, %86 : vector<8x128xf32>
    %cst_35 = arith.constant 5.000000e-01 : f32
    %88 = vector.broadcast %cst_35 : f32 to vector<8x128xf32>
    %89 = arith.mulf %88, %87 : vector<8x128xf32>
    %cst_36 = arith.constant 0.707106769 : f32
    %90 = vector.broadcast %cst_36 : f32 to vector<8x128xf32>
    %91 = arith.mulf %87, %90 : vector<8x128xf32>
    %92 = math.absf %91 : vector<8x128xf32>
    %cst_37 = arith.constant 0.327591091 : f32
    %93 = vector.broadcast %cst_37 : f32 to vector<8x128xf32>
    %94 = arith.mulf %93, %92 : vector<8x128xf32>
    %cst_38 = arith.constant 1.000000e+00 : f32
    %95 = vector.broadcast %cst_38 : f32 to vector<8x128xf32>
    %96 = arith.addf %95, %94 : vector<8x128xf32>
    %cst_39 = arith.constant 1.000000e+00 : f32
    %97 = vector.broadcast %cst_39 : f32 to vector<8x128xf32>
    %98 = arith.divf %97, %96 : vector<8x128xf32>
    %cst_40 = arith.constant 1.06140542 : f32
    %99 = vector.broadcast %cst_40 : f32 to vector<8x128xf32>
    %100 = arith.mulf %99, %98 : vector<8x128xf32>
    %cst_41 = arith.constant -1.45315206 : f32
    %101 = vector.broadcast %cst_41 : f32 to vector<8x128xf32>
    %102 = arith.addf %100, %101 : vector<8x128xf32>
    %103 = arith.mulf %102, %98 : vector<8x128xf32>
    %cst_42 = arith.constant 1.42141378 : f32
    %104 = vector.broadcast %cst_42 : f32 to vector<8x128xf32>
    %105 = arith.addf %103, %104 : vector<8x128xf32>
    %106 = arith.mulf %105, %98 : vector<8x128xf32>
    %cst_43 = arith.constant -0.284496725 : f32
    %107 = vector.broadcast %cst_43 : f32 to vector<8x128xf32>
    %108 = arith.addf %106, %107 : vector<8x128xf32>
    %109 = arith.mulf %108, %98 : vector<8x128xf32>
    %cst_44 = arith.constant 0.254829586 : f32
    %110 = vector.broadcast %cst_44 : f32 to vector<8x128xf32>
    %111 = arith.addf %109, %110 : vector<8x128xf32>
    %112 = arith.mulf %111, %98 : vector<8x128xf32>
    %cst_45 = arith.constant 0.000000e+00 : f32
    %113 = vector.broadcast %cst_45 : f32 to vector<8x128xf32>
    %114 = arith.subf %113, %92 : vector<8x128xf32>
    %115 = arith.mulf %114, %92 : vector<8x128xf32>
    %116 = math.exp %115 : vector<8x128xf32>
    %117 = arith.mulf %112, %116 : vector<8x128xf32>
    %cst_46 = arith.constant 1.000000e+00 : f32
    %118 = vector.broadcast %cst_46 : f32 to vector<8x128xf32>
    %119 = arith.subf %118, %117 : vector<8x128xf32>
    %cst_47 = arith.constant 0.000000e+00 : f32
    %120 = vector.broadcast %cst_47 : f32 to vector<8x128xf32>
    %121 = arith.cmpf oge, %91, %120 : vector<8x128xf32>
    %cst_48 = arith.constant 0.000000e+00 : f32
    %122 = vector.broadcast %cst_48 : f32 to vector<8x128xf32>
    %123 = arith.subf %122, %119 : vector<8x128xf32>
    %124 = arith.select %121, %119, %123 : vector<8x128xi1>, vector<8x128xf32>
    %cst_49 = arith.constant 1.000000e+00 : f32
    %125 = vector.broadcast %cst_49 : f32 to vector<8x128xf32>
    %126 = arith.addf %125, %124 : vector<8x128xf32>
    %127 = arith.mulf %89, %126 : vector<8x128xf32>
    %128 = arith.truncf %127 : vector<8x128xf32> to vector<8x128xbf16>
    %c0_50 = arith.constant 0 : index
    %c0_51 = arith.constant 0 : index
    %129 = vector.load %arg11[%c0_50, %c0_51] : memref<128x32xbf16, #tpu.memory_space<vmem>>, vector<128x32xbf16>
    %cst_52 = arith.constant dense<0.000000e+00> : vector<8x32xf32>
    %130 = tpu.matmul %128, %129, %cst_52 {dimension_numbers = #tpu.dot_dimension_numbers<[1], [0], [0], [1], [0, 0, 1, 1], [], []>} : vector<8x128xbf16>, vector<128x32xbf16>, vector<8x32xf32> -> vector<8x32xf32>
    %c0_53 = arith.constant 0 : index
    %c0_54 = arith.constant 0 : index
    %131 = vector.load %arg12[%c0_53, %c0_54] : memref<1x32xf32, #tpu.memory_space<vmem>>, vector<1x32xf32>
    %132 = vector.broadcast %131 : vector<1x32xf32> to vector<8x32xf32>
    %133 = arith.addf %130, %132 : vector<8x32xf32>
    %134 = arith.addf %81, %133 : vector<8x32xf32>
    %c0_55 = arith.constant 0 : index
    %c0_56 = arith.constant 0 : index
    %135 = vector.load %arg13[%c0_55, %c0_56] : memref<1x32xf32, #tpu.memory_space<vmem>>, vector<1x32xf32>
    %c0_57 = arith.constant 0 : index
    %c0_58 = arith.constant 0 : index
    %136 = vector.load %arg14[%c0_57, %c0_58] : memref<1x32xf32, #tpu.memory_space<vmem>>, vector<1x32xf32>
    %cst_59 = arith.constant dense<0.000000e+00> : vector<8xf32>
    %137 = vector.multi_reduction <add>, %134, %cst_59 [1] : vector<8x32xf32> to vector<8xf32>
    %138 = vector.shape_cast %137 : vector<8xf32> to vector<8x1xf32>
    %cst_60 = arith.constant 3.200000e+01 : f32
    %139 = vector.broadcast %cst_60 : f32 to vector<8x1xf32>
    %140 = arith.divf %138, %139 : vector<8x1xf32>
    %141 = vector.broadcast %140 : vector<8x1xf32> to vector<8x32xf32>
    %142 = arith.subf %134, %141 : vector<8x32xf32>
    %143 = arith.mulf %142, %142 : vector<8x32xf32>
    %cst_61 = arith.constant dense<0.000000e+00> : vector<8xf32>
    %144 = vector.multi_reduction <add>, %143, %cst_61 [1] : vector<8x32xf32> to vector<8xf32>
    %145 = vector.shape_cast %144 : vector<8xf32> to vector<8x1xf32>
    %cst_62 = arith.constant 3.200000e+01 : f32
    %146 = vector.broadcast %cst_62 : f32 to vector<8x1xf32>
    %147 = arith.divf %145, %146 : vector<8x1xf32>
    %148 = vector.broadcast %140 : vector<8x1xf32> to vector<8x32xf32>
    %149 = arith.subf %134, %148 : vector<8x32xf32>
    %cst_63 = arith.constant 9.99999974E-6 : f32
    %150 = vector.broadcast %cst_63 : f32 to vector<8x1xf32>
    %151 = arith.addf %147, %150 : vector<8x1xf32>
    %152 = math.rsqrt %151 : vector<8x1xf32>
    %153 = vector.broadcast %152 : vector<8x1xf32> to vector<8x32xf32>
    %154 = arith.mulf %149, %153 : vector<8x32xf32>
    %155 = vector.broadcast %135 : vector<1x32xf32> to vector<8x32xf32>
    %156 = arith.mulf %154, %155 : vector<8x32xf32>
    %157 = vector.broadcast %136 : vector<1x32xf32> to vector<8x32xf32>
    %158 = arith.addf %156, %157 : vector<8x32xf32>
    %c0_64 = arith.constant 0 : index
    %c0_65 = arith.constant 0 : index
    %c0_66 = arith.constant 0 : index
    %159 = vector.load %arg15[%c0_64, %c0_65, %c0_66] : memref<1x8x32xf32, #tpu.memory_space<vmem>>, vector<1x8x32xf32>
    %160 = vector.shape_cast %159 : vector<1x8x32xf32> to vector<8x32xf32>
    %161 = vector.shape_cast %158 : vector<8x32xf32> to vector<1x8x32xf32>
    tpu.vector_store %arg15[%c0_64, %c0_65, %c0_66], %161 {strides = array<i32>} : memref<1x8x32xf32, #tpu.memory_space<vmem>>, vector<1x8x32xf32>,
    return
  }
  func.func @transform_0(%arg0: i32) -> (i32, i32, i32) {
    %c0_i32 = arith.constant 0 : i32
    %c0_i32_0 = arith.constant 0 : i32
    %c0_i32_1 = arith.constant 0 : i32
    return %arg0, %c0_i32, %c0_i32_0 : i32, i32, i32
  }
  func.func @transform_1(%arg0: i32) -> (i32, i32, i32) {
    %c0_i32 = arith.constant 0 : i32
    %c0_i32_0 = arith.constant 0 : i32
    %c0_i32_1 = arith.constant 0 : i32
    return %arg0, %c0_i32, %c0_i32_0 : i32, i32, i32
  }
  func.func @transform_2(%arg0: i32) -> (i32, i32) {
    %c0_i32 = arith.constant 0 : i32
    %c0_i32_0 = arith.constant 0 : i32
    %c0_i32_1 = arith.constant 0 : i32
    return %c0_i32, %c0_i32_0 : i32, i32
  }
  func.func @transform_3(%arg0: i32) -> (i32, i32) {
    %c0_i32 = arith.constant 0 : i32
    %c0_i32_0 = arith.constant 0 : i32
    %c0_i32_1 = arith.constant 0 : i32
    return %c0_i32, %c0_i32_0 : i32, i32
  }
  func.func @transform_4(%arg0: i32) -> (i32, i32) {
    %c0_i32 = arith.constant 0 : i32
    %c0_i32_0 = arith.constant 0 : i32
    %c0_i32_1 = arith.constant 0 : i32
    return %c0_i32, %c0_i32_0 : i32, i32
  }
  func.func @transform_5(%arg0: i32) -> (i32, i32) {
    %c0_i32 = arith.constant 0 : i32
    %c0_i32_0 = arith.constant 0 : i32
    %c0_i32_1 = arith.constant 0 : i32
    return %c0_i32, %c0_i32_0 : i32, i32
  }
  func.func @transform_6(%arg0: i32) -> (i32, i32) {
    %c0_i32 = arith.constant 0 : i32
    %c0_i32_0 = arith.constant 0 : i32
    %c0_i32_1 = arith.constant 0 : i32
    return %c0_i32, %c0_i32_0 : i32, i32
  }
  func.func @transform_7(%arg0: i32) -> (i32, i32) {
    %c0_i32 = arith.constant 0 : i32
    %c0_i32_0 = arith.constant 0 : i32
    %c0_i32_1 = arith.constant 0 : i32
    return %c0_i32, %c0_i32_0 : i32, i32
  }
  func.func @transform_8(%arg0: i32) -> (i32, i32) {
    %c0_i32 = arith.constant 0 : i32
    %c0_i32_0 = arith.constant 0 : i32
    %c0_i32_1 = arith.constant 0 : i32
    return %c0_i32, %c0_i32_0 : i32, i32
  }
  func.func @transform_9(%arg0: i32) -> (i32, i32) {
    %c0_i32 = arith.constant 0 : i32
    %c0_i32_0 = arith.constant 0 : i32
    %c0_i32_1 = arith.constant 0 : i32
    return %c0_i32, %c0_i32_0 : i32, i32
  }
  func.func @transform_10(%arg0: i32) -> (i32, i32) {
    %c0_i32 = arith.constant 0 : i32
    %c0_i32_0 = arith.constant 0 : i32
    %c0_i32_1 = arith.constant 0 : i32
    return %c0_i32, %c0_i32_0 : i32, i32
  }
  func.func @transform_11(%arg0: i32) -> (i32, i32) {
    %c0_i32 = arith.constant 0 : i32
    %c0_i32_0 = arith.constant 0 : i32
    %c0_i32_1 = arith.constant 0 : i32
    return %c0_i32, %c0_i32_0 : i32, i32
  }
  func.func @transform_12(%arg0: i32) -> (i32, i32) {
    %c0_i32 = arith.constant 0 : i32
    %c0_i32_0 = arith.constant 0 : i32
    %c0_i32_1 = arith.constant 0 : i32
    return %c0_i32, %c0_i32_0 : i32, i32
  }
  func.func @transform_13(%arg0: i32) -> (i32, i32) {
    %c0_i32 = arith.constant 0 : i32
    %c0_i32_0 = arith.constant 0 : i32
    %c0_i32_1 = arith.constant 0 : i32
    return %c0_i32, %c0_i32_0 : i32, i32
  }
  func.func @transform_14(%arg0: i32) -> (i32, i32, i32) {
    %c0_i32 = arith.constant 0 : i32
    %c0_i32_0 = arith.constant 0 : i32
    %c0_i32_1 = arith.constant 0 : i32
    return %arg0, %c0_i32, %c0_i32_0 : i32, i32, i32
  }
}

</mosaic_0001>

<llo_original>
// kernel: tpu_custom_call.1
$region0: #{tpu_custom_call.1}
  #allocation0 [shape = 'u32[]', space=smem, size = 0x4, offset = 0x4, fixed_abs, tag = 'smem constant byte address 0x4 - core index']
  #allocation1 [shape = 'u32[144,128]{1,0:T(1,128)}', space=vmem, size = 0x12000, scoped, tag = 'internal scratch']
  %s0 = inlined_call_operand.hbm [shape: f32[2,8,32], index: 0, kind: input, shape index: {}]
  %s1 = inlined_call_operand.hbm [shape: f32[2,1,8], index: 1, kind: input, shape index: {}]
  %s2 = inlined_call_operand.hbm [shape: bf16[32,96], index: 2, kind: input, shape index: {}]
  %s3 = inlined_call_operand.hbm [shape: f32[1,96], index: 3, kind: input, shape index: {}]
  %s4 = inlined_call_operand.hbm [shape: bf16[32,32], index: 4, kind: input, shape index: {}]
  %s5 = inlined_call_operand.hbm [shape: f32[1,32], index: 5, kind: input, shape index: {}]
  %s6 = inlined_call_operand.hbm [shape: f32[1,32], index: 6, kind: input, shape index: {}]
  %s7 = inlined_call_operand.hbm [shape: f32[1,32], index: 7, kind: input, shape index: {}]
  %s8 = inlined_call_operand.hbm [shape: bf16[32,128], index: 8, kind: input, shape index: {}]
  %s9 = inlined_call_operand.hbm [shape: f32[1,128], index: 9, kind: input, shape index: {}]
  %s10 = inlined_call_operand.hbm [shape: bf16[128,32], index: 10, kind: input, shape index: {}]
  %s11 = inlined_call_operand.hbm [shape: f32[1,32], index: 11, kind: input, shape index: {}]
  %s12 = inlined_call_operand.hbm [shape: f32[1,32], index: 12, kind: input, shape index: {}]
  %s13 = inlined_call_operand.hbm [shape: f32[1,32], index: 13, kind: input, shape index: {}]
  %s14 = inlined_call_operand.hbm [shape: f32[2,8,32], index: 14, kind: output, shape index: {}]
  %s15 = sld [smem:[#allocation0]]
  $region145: #{tpu_custom_call.1} parent=0
    _
  %s17 = ssub.s32 1, %s15
  %s18 = scalar_select 0, %s17, %s15
  $region1: #{tpu_custom_call.1} parent=0
    #allocation2 [shape = 'u8[8192]{0}', space=vmem, size = 0x2000, scoped, tag = 'input window, operand 0']
    #allocation3 [shape = 's32[2]{0}', space=sflag, size = 0x8, scoped, tag = 'scoped memory for tpu_custom_call.1']
    #allocation4 [shape = 's32[2]{0}', space=sflag, size = 0x8, scoped, tag = 'scoped memory for tpu_custom_call.1']
    #allocation5 [shape = 'u8[1024]{0}', space=vmem, size = 0x400, scoped, tag = 'input window, operand 1']
    #allocation6 [shape = 's32[2]{0}', space=sflag, size = 0x8, scoped, tag = 'scoped memory for tpu_custom_call.1']
    #allocation7 [shape = 'u8[8192]{0}', space=vmem, size = 0x2000, scoped, tag = 'input window, operand 2, single buffered']
    #allocation8 [shape = 'u8[512]{0}', space=vmem, size = 0x400, scoped, tag = 'input window, operand 3, single buffered']
    #allocation9 [shape = 's32[1]{0}', space=sflag, size = 0x4, scoped, tag = 'scoped memory for tpu_custom_call.1']
    #allocation10 [shape = 'u8[8192]{0}', space=vmem, size = 0x2000, scoped, tag = 'input window, operand 4, single buffered']
    #allocation11 [shape = 'u8[512]{0}', space=vmem, size = 0x400, scoped, tag = 'input window, operand 5, single buffered']
    #allocation12 [shape = 's32[1]{0}', space=sflag, size = 0x4, scoped, tag = 'scoped memory for tpu_custom_call.1']
    #allocation13 [shape = 'u8[512]{0}', space=vmem, size = 0x400, scoped, tag = 'input window, operand 6, single buffered']
    #allocation14 [shape = 'u8[512]{0}', space=vmem, size = 0x400, scoped, tag = 'input window, operand 7, single buffered']
    #allocation15 [shape = 's32[1]{0}', space=sflag, size = 0x4, scoped, tag = 'scoped memory for tpu_custom_call.1']
    #allocation16 [shape = 'u8[8192]{0}', space=vmem, size = 0x2000, scoped, tag = 'input window, operand 8, single buffered']
    #allocation17 [shape = 'u8[512]{0}', space=vmem, size = 0x400, scoped, tag = 'input window, operand 9, single buffered']
    #allocation18 [shape = 's32[1]{0}', space=sflag, size = 0x4, scoped, tag = 'scoped memory for tpu_custom_call.1']
    #allocation19 [shape = 'u8[32768]{0}', space=vmem, size = 0x8000, scoped, tag = 'input window, operand 10, single buffered']
    #allocation20 [shape = 'u8[512]{0}', space=vmem, size = 0x400, scoped, tag = 'input window, operand 11, single buffered']
    #allocation21 [shape = 's32[1]{0}', space=sflag, size = 0x4, scoped, tag = 'scoped memory for tpu_custom_call.1']
    #allocation22 [shape = 'u8[512]{0}', space=vmem, size = 0x400, scoped, tag = 'input window, operand 12, single buffered']
    #allocation23 [shape = 'u8[512]{0}', space=vmem, size = 0x400, scoped, tag = 'input window, operand 13, single buffered']
    #allocation24 [shape = 's32[1]{0}', space=sflag, size = 0x4, scoped, tag = 'scoped memory for tpu_custom_call.1']
    #allocation25 [shape = 'u8[8192]{0}', space=vmem, size = 0x2000, scoped, tag = 'output window, operand 0']
    %19 = vsyncpa [#allocation3], 0
    %s20 = scalar_lea.sflag [#allocation3], 1
    %21 = vsyncpa %s20, 0
    %22 = vsyncpa [#allocation6], 0
    %s23 = scalar_lea.sflag [#allocation6], 1
    %24 = vsyncpa %s23, 0
    %25 = vsyncpa [#allocation9], 0
    %26 = vsyncpa [#allocation12], 0
    %27 = vsyncpa [#allocation15], 0
    %28 = vsyncpa [#allocation18], 0
    %29 = vsyncpa [#allocation21], 0
    %30 = vsyncpa [#allocation24], 0
    %31 = vsyncpa [#allocation4], 0
    %s32 = scalar_lea.sflag [#allocation4], 1
    %33 = vsyncpa %s32, 0
    loop: start=0, step=1, limit=4
    $region2: #{tpu_custom_call.1} parent=1 // loop_pre_header
      _
    $region3: #{tpu_custom_call.1} parent=1 // loop_header
      %s35 = sphi 0, %s39
      %p36 = scmp.ge.s32.totalorder %s35, 4
      %s45 = sphi 0, %s47
      %s48 = sphi 0, %s45
      %s49 = sphi 0, %s48
      %s65 = sphi 0, %s49
      %s71 = sphi 0, %s73
      %s74 = sphi 0, %s71
      %s75 = sphi 0, %s74
      %s91 = sphi 0, %s75
      %s95 = sphi 0, %s95
      %s97 = sphi 0, %s95
      %s98 = sphi 0, %s97
      %s112 = sphi 0, %s98
      %s116 = sphi 0, %s116
      %s118 = sphi 0, %s116
      %s119 = sphi 0, %s118
      %s133 = sphi 0, %s119
      %s137 = sphi 0, %s137
      %s139 = sphi 0, %s137
      %s140 = sphi 0, %s139
      %s154 = sphi 0, %s140
      %s158 = sphi 0, %s158
      %s160 = sphi 0, %s158
      %s161 = sphi 0, %s160
      %s175 = sphi 0, %s161
      %s179 = sphi 0, %s179
      %s181 = sphi 0, %s179
      %s182 = sphi 0, %s181
      %s196 = sphi 0, %s182
      %s200 = sphi 0, %s200
      %s202 = sphi 0, %s200
      %s203 = sphi 0, %s202
      %s217 = sphi 0, %s203
      %s221 = sphi 0, %s221
      %s223 = sphi 0, %s221
      %s224 = sphi 0, %s223
      %s238 = sphi 0, %s224
      %s242 = sphi 0, %s242
      %s244 = sphi 0, %s242
      %s245 = sphi 0, %s244
      %s259 = sphi 0, %s245
      %s263 = sphi 0, %s263
      %s265 = sphi 0, %s263
      %s266 = sphi 0, %s265
      %s280 = sphi 0, %s266
      %s284 = sphi 0, %s284
      %s286 = sphi 0, %s284
      %s287 = sphi 0, %s286
      %s301 = sphi 0, %s287
      %s305 = sphi 0, %s305
      %s307 = sphi 0, %s305
      %s308 = sphi 0, %s307
      %s322 = sphi 0, %s308
      %s326 = sphi 0, %s326
      %s328 = sphi 0, %s326
      %s329 = sphi 0, %s328
      %s343 = sphi 0, %s329
      %s349 = sphi 0, %s351
      %s352 = sphi 0, %s349
      %s353 = sphi 0, %s352
      %s369 = sphi 0, %s353
    $region4: #{tpu_custom_call.1} parent=1 // loop_header_branch
      %38 = sbr.rel (%p36) target = $region8
    $region5: #{tpu_custom_call.1} parent=1 // loop_body
      %s40 = ssub.s32 %s35, 1
      %s41 = ssub.s32 %s35, 2
      %s42 = sadd.s32 %s35, 1
      %s43 = ssub.s32 %s35, %s42
      %p44 = scmp.eq.s32.totalorder %s43, 0
      %s46 = sadd.s32 %s45, 1
      %s47 = scalar_select %p44, %s45, %s46
      %p50 = pneg %p44
      %p51 = scmp.eq.s32.totalorder %s35, 1
      %p52 = por %p50, %p51
      %p53 = scmp.ne.s32.totalorder %s45, %s48
      %p54 = scmp.eq.s32.totalorder %s35, 0
      %p55 = por %p53, %p54
      %p56 = scmp.ne.s32.totalorder %s45, %s48
      %p57 = scmp.eq.s32.totalorder %s40, 1
      %p58 = por %p56, %p57
      %p59 = scmp.ne.s32.totalorder %s48, %s49
      %p60 = scmp.eq.s32.totalorder %s40, 0
      %p61 = por %p59, %p60
      %p62 = scmp.ne.s32.totalorder %s48, %s49
      %p63 = scmp.eq.s32.totalorder %s41, 1
      %p64 = por %p62, %p63
      %p66 = scmp.ne.s32.totalorder %s49, %s65
      %p67 = scmp.eq.s32.totalorder %s41, 0
      %p68 = por %p66, %p67
      %s69 = ssub.s32 %s35, %s42
      %p70 = scmp.eq.s32.totalorder %s69, 0
      %s72 = sadd.s32 %s71, 1
      %s73 = scalar_select %p70, %s71, %s72
      %p76 = pneg %p70
      %p77 = scmp.eq.s32.totalorder %s35, 1
      %p78 = por %p76, %p77
      %p79 = scmp.ne.s32.totalorder %s71, %s74
      %p80 = scmp.eq.s32.totalorder %s35, 0
      %p81 = por %p79, %p80
      %p82 = scmp.ne.s32.totalorder %s71, %s74
      %p83 = scmp.eq.s32.totalorder %s40, 1
      %p84 = por %p82, %p83
      %p85 = scmp.ne.s32.totalorder %s74, %s75
      %p86 = scmp.eq.s32.totalorder %s40, 0
      %p87 = por %p85, %p86
      %p88 = scmp.ne.s32.totalorder %s74, %s75
      %p89 = scmp.eq.s32.totalorder %s41, 1
      %p90 = por %p88, %p89
      %p92 = scmp.ne.s32.totalorder %s75, %s91
      %p93 = scmp.eq.s32.totalorder %s41, 0
      %p94 = por %p92, %p93
      %s96 = sadd.s32 %s95, 1
      %p99 = scmp.eq.s32.totalorder %s35, 1
      %p100 = scmp.ne.s32.totalorder %s95, %s97
      %p101 = scmp.eq.s32.totalorder %s35, 0
      %p102 = por %p100, %p101
      %p103 = scmp.ne.s32.totalorder %s95, %s97
      %p104 = scmp.eq.s32.totalorder %s40, 1
      %p105 = por %p103, %p104
      %p106 = scmp.ne.s32.totalorder %s97, %s98
      %p107 = scmp.eq.s32.totalorder %s40, 0
      %p108 = por %p106, %p107
      %p109 = scmp.ne.s32.totalorder %s97, %s98
      %p110 = scmp.eq.s32.totalorder %s41, 1
      %p111 = por %p109, %p110
      %p113 = scmp.ne.s32.totalorder %s98, %s112
      %p114 = scmp.eq.s32.totalorder %s41, 0
      %p115 = por %p113, %p114
      %s117 = sadd.s32 %s116, 1
      %p120 = scmp.eq.s32.totalorder %s35, 1
      %p121 = scmp.ne.s32.totalorder %s116, %s118
      %p122 = scmp.eq.s32.totalorder %s35, 0
      %p123 = por %p121, %p122
      %p124 = scmp.ne.s32.totalorder %s116, %s118
      %p125 = scmp.eq.s32.totalorder %s40, 1
      %p126 = por %p124, %p125
      %p127 = scmp.ne.s32.totalorder %s118, %s119
      %p128 = scmp.eq.s32.totalorder %s40, 0
      %p129 = por %p127, %p128
      %p130 = scmp.ne.s32.totalorder %s118, %s119
      %p131 = scmp.eq.s32.totalorder %s41, 1
      %p132 = por %p130, %p131
      %p134 = scmp.ne.s32.totalorder %s119, %s133
      %p135 = scmp.eq.s32.totalorder %s41, 0
      %p136 = por %p134, %p135
      %s138 = sadd.s32 %s137, 1
      %p141 = scmp.eq.s32.totalorder %s35, 1
      %p142 = scmp.ne.s32.totalorder %s137, %s139
      %p143 = scmp.eq.s32.totalorder %s35, 0
      %p144 = por %p142, %p143
      %p145 = scmp.ne.s32.totalorder %s137, %s139
      %p146 = scmp.eq.s32.totalorder %s40, 1
      %p147 = por %p145, %p146
      %p148 = scmp.ne.s32.totalorder %s139, %s140
      %p149 = scmp.eq.s32.totalorder %s40, 0
      %p150 = por %p148, %p149
      %p151 = scmp.ne.s32.totalorder %s139, %s140
      %p152 = scmp.eq.s32.totalorder %s41, 1
      %p153 = por %p151, %p152
      %p155 = scmp.ne.s32.totalorder %s140, %s154
      %p156 = scmp.eq.s32.totalorder %s41, 0
      %p157 = por %p155, %p156
      %s159 = sadd.s32 %s158, 1
      %p162 = scmp.eq.s32.totalorder %s35, 1
      %p163 = scmp.ne.s32.totalorder %s158, %s160
      %p164 = scmp.eq.s32.totalorder %s35, 0
      %p165 = por %p163, %p164
      %p166 = scmp.ne.s32.totalorder %s158, %s160
      %p167 = scmp.eq.s32.totalorder %s40, 1
      %p168 = por %p166, %p167
      %p169 = scmp.ne.s32.totalorder %s160, %s161
      %p170 = scmp.eq.s32.totalorder %s40, 0
      %p171 = por %p169, %p170
      %p172 = scmp.ne.s32.totalorder %s160, %s161
      %p173 = scmp.eq.s32.totalorder %s41, 1
      %p174 = por %p172, %p173
      %p176 = scmp.ne.s32.totalorder %s161, %s175
      %p177 = scmp.eq.s32.totalorder %s41, 0
      %p178 = por %p176, %p177
      %s180 = sadd.s32 %s179, 1
      %p183 = scmp.eq.s32.totalorder %s35, 1
      %p184 = scmp.ne.s32.totalorder %s179, %s181
      %p185 = scmp.eq.s32.totalorder %s35, 0
      %p186 = por %p184, %p185
      %p187 = scmp.ne.s32.totalorder %s179, %s181
      %p188 = scmp.eq.s32.totalorder %s40, 1
      %p189 = por %p187, %p188
      %p190 = scmp.ne.s32.totalorder %s181, %s182
      %p191 = scmp.eq.s32.totalorder %s40, 0
      %p192 = por %p190, %p191
      %p193 = scmp.ne.s32.totalorder %s181, %s182
      %p194 = scmp.eq.s32.totalorder %s41, 1
      %p195 = por %p193, %p194
      %p197 = scmp.ne.s32.totalorder %s182, %s196
      %p198 = scmp.eq.s32.totalorder %s41, 0
      %p199 = por %p197, %p198
      %s201 = sadd.s32 %s200, 1
      %p204 = scmp.eq.s32.totalorder %s35, 1
      %p205 = scmp.ne.s32.totalorder %s200, %s202
      %p206 = scmp.eq.s32.totalorder %s35, 0
      %p207 = por %p205, %p206
      %p208 = scmp.ne.s32.totalorder %s200, %s202
      %p209 = scmp.eq.s32.totalorder %s40, 1
      %p210 = por %p208, %p209
      %p211 = scmp.ne.s32.totalorder %s202, %s203
      %p212 = scmp.eq.s32.totalorder %s40, 0
      %p213 = por %p211, %p212
      %p214 = scmp.ne.s32.totalorder %s202, %s203
      %p215 = scmp.eq.s32.totalorder %s41, 1
      %p216 = por %p214, %p215
      %p218 = scmp.ne.s32.totalorder %s203, %s217
      %p219 = scmp.eq.s32.totalorder %s41, 0
      %p220 = por %p218, %p219
      %s222 = sadd.s32 %s221, 1
      %p225 = scmp.eq.s32.totalorder %s35, 1
      %p226 = scmp.ne.s32.totalorder %s221, %s223
      %p227 = scmp.eq.s32.totalorder %s35, 0
      %p228 = por %p226, %p227
      %p229 = scmp.ne.s32.totalorder %s221, %s223
      %p230 = scmp.eq.s32.totalorder %s40, 1
      %p231 = por %p229, %p230
      %p232 = scmp.ne.s32.totalorder %s223, %s224
      %p233 = scmp.eq.s32.totalorder %s40, 0
      %p234 = por %p232, %p233
      %p235 = scmp.ne.s32.totalorder %s223, %s224
      %p236 = scmp.eq.s32.totalorder %s41, 1
      %p237 = por %p235, %p236
      %p239 = scmp.ne.s32.totalorder %s224, %s238
      %p240 = scmp.eq.s32.totalorder %s41, 0
      %p241 = por %p239, %p240
      %s243 = sadd.s32 %s242, 1
      %p246 = scmp.eq.s32.totalorder %s35, 1
      %p247 = scmp.ne.s32.totalorder %s242, %s244
      %p248 = scmp.eq.s32.totalorder %s35, 0
      %p249 = por %p247, %p248
      %p250 = scmp.ne.s32.totalorder %s242, %s244
      %p251 = scmp.eq.s32.totalorder %s40, 1
      %p252 = por %p250, %p251
      %p253 = scmp.ne.s32.totalorder %s244, %s245
      %p254 = scmp.eq.s32.totalorder %s40, 0
      %p255 = por %p253, %p254
      %p256 = scmp.ne.s32.totalorder %s244, %s245
      %p257 = scmp.eq.s32.totalorder %s41, 1
      %p258 = por %p256, %p257
      %p260 = scmp.ne.s32.totalorder %s245, %s259
      %p261 = scmp.eq.s32.totalorder %s41, 0
      %p262 = por %p260, %p261
      %s264 = sadd.s32 %s263, 1
      %p267 = scmp.eq.s32.totalorder %s35, 1
      %p268 = scmp.ne.s32.totalorder %s263, %s265
      %p269 = scmp.eq.s32.totalorder %s35, 0
      %p270 = por %p268, %p269
      %p271 = scmp.ne.s32.totalorder %s263, %s265
      %p272 = scmp.eq.s32.totalorder %s40, 1
      %p273 = por %p271, %p272
      %p274 = scmp.ne.s32.totalorder %s265, %s266
      %p275 = scmp.eq.s32.totalorder %s40, 0
      %p276 = por %p274, %p275
      %p277 = scmp.ne.s32.totalorder %s265, %s266
      %p278 = scmp.eq.s32.totalorder %s41, 1
      %p279 = por %p277, %p278
      %p281 = scmp.ne.s32.totalorder %s266, %s280
      %p282 = scmp.eq.s32.totalorder %s41, 0
      %p283 = por %p281, %p282
      %s285 = sadd.s32 %s284, 1
      %p288 = scmp.eq.s32.totalorder %s35, 1
      %p289 = scmp.ne.s32.totalorder %s284, %s286
      %p290 = scmp.eq.s32.totalorder %s35, 0
      %p291 = por %p289, %p290
      %p292 = scmp.ne.s32.totalorder %s284, %s286
      %p293 = scmp.eq.s32.totalorder %s40, 1
      %p294 = por %p292, %p293
      %p295 = scmp.ne.s32.totalorder %s286, %s287
      %p296 = scmp.eq.s32.totalorder %s40, 0
      %p297 = por %p295, %p296
      %p298 = scmp.ne.s32.totalorder %s286, %s287
      %p299 = scmp.eq.s32.totalorder %s41, 1
      %p300 = por %p298, %p299
      %p302 = scmp.ne.s32.totalorder %s287, %s301
      %p303 = scmp.eq.s32.totalorder %s41, 0
      %p304 = por %p302, %p303
      %s306 = sadd.s32 %s305, 1
      %p309 = scmp.eq.s32.totalorder %s35, 1
      %p310 = scmp.ne.s32.totalorder %s305, %s307
      %p311 = scmp.eq.s32.totalorder %s35, 0
      %p312 = por %p310, %p311
      %p313 = scmp.ne.s32.totalorder %s305, %s307
      %p314 = scmp.eq.s32.totalorder %s40, 1
      %p315 = por %p313, %p314
      %p316 = scmp.ne.s32.totalorder %s307, %s308
      %p317 = scmp.eq.s32.totalorder %s40, 0
      %p318 = por %p316, %p317
      %p319 = scmp.ne.s32.totalorder %s307, %s308
      %p320 = scmp.eq.s32.totalorder %s41, 1
      %p321 = por %p319, %p320
      %p323 = scmp.ne.s32.totalorder %s308, %s322
      %p324 = scmp.eq.s32.totalorder %s41, 0
      %p325 = por %p323, %p324
      %s327 = sadd.s32 %s326, 1
      %p330 = scmp.eq.s32.totalorder %s35, 1
      %p331 = scmp.ne.s32.totalorder %s326, %s328
      %p332 = scmp.eq.s32.totalorder %s35, 0
      %p333 = por %p331, %p332
      %p334 = scmp.ne.s32.totalorder %s326, %s328
      %p335 = scmp.eq.s32.totalorder %s40, 1
      %p336 = por %p334, %p335
      %p337 = scmp.ne.s32.totalorder %s328, %s329
      %p338 = scmp.eq.s32.totalorder %s40, 0
      %p339 = por %p337, %p338
      %p340 = scmp.ne.s32.totalorder %s328, %s329
      %p341 = scmp.eq.s32.totalorder %s41, 1
      %p342 = por %p340, %p341
      %p344 = scmp.ne.s32.totalorder %s329, %s343
      %p345 = scmp.eq.s32.totalorder %s41, 0
      %p346 = por %p344, %p345
      %s347 = ssub.s32 %s35, %s42
      %p348 = scmp.eq.s32.totalorder %s347, 0
      %s350 = sadd.s32 %s349, 1
      %s351 = scalar_select %p348, %s349, %s350
      %p354 = pneg %p348
      %p355 = scmp.eq.s32.totalorder %s35, 1
      %p356 = por %p354, %p355
      %p357 = scmp.ne.s32.totalorder %s349, %s352
      %p358 = scmp.eq.s32.totalorder %s35, 0
      %p359 = por %p357, %p358
      %p360 = scmp.ne.s32.totalorder %s349, %s352
      %p361 = scmp.eq.s32.totalorder %s40, 1
      %p362 = por %p360, %p361
      %p363 = scmp.ne.s32.totalorder %s352, %s353
      %p364 = scmp.eq.s32.totalorder %s40, 0
      %p365 = por %p363, %p364
      %p366 = scmp.ne.s32.totalorder %s352, %s353
      %p367 = scmp.eq.s32.totalorder %s41, 1
      %p368 = por %p366, %p367
      %p370 = scmp.ne.s32.totalorder %s353, %s369
      %p371 = scmp.eq.s32.totalorder %s41, 0
      %p372 = por %p370, %p371
      %p373 = scmp.le.s32.totalorder 1, %s35
      %p374 = scmp.lt.s32.totalorder %s35, 3
      %p375 = pnand %p373, %p374
      %p376 = pneg %p375
      // Predicated region
      $region9: #{tpu_custom_call.1} parent=5 // pred_check
        _
      $region10: #{tpu_custom_call.1} parent=5 // pred_check_branch
        %378 = sbr.rel (%p375) target = $region12
      $region11: #{tpu_custom_call.1} parent=5 // pred_region
        %s379 = ssub.s32 %s35, 1
        // Predicated region
        $region13: #{tpu_custom_call.1} parent=11 // pred_check
          %p380 = pneg %p108
        $region14: #{tpu_custom_call.1} parent=11 // pred_check_branch
          %382 = sbr.rel (%p380) target = $region16
        $region15: #{tpu_custom_call.1} parent=11 // pred_region
          %s384 = ssub.s32 256, 256
          %385 = vsyncadd [#allocation6], %s384
          %s386 = sshll.u32 [#allocation7], 4
          %s387 = int_to_ptr.vmem [resolvable:$true] %s386
          %392 = dma.hbm_to_vmem [thread:$0]  %s2, 256, %s387, [#allocation6], 64, 64, 4
        $region16: #{tpu_custom_call.1} parent=11 // pred_fallthru
          _
        // Predicated region
        $region17: #{tpu_custom_call.1} parent=11 // pred_check
          %p393 = pneg %p129
        $region18: #{tpu_custom_call.1} parent=11 // pred_check_branch
          %395 = sbr.rel (%p393) target = $region20
        $region19: #{tpu_custom_call.1} parent=11 // pred_region
          %s397 = ssub.s32 16, 16
          %398 = vsyncadd [#allocation9], %s397
          %s400 = sshll.u32 [#allocation8], 4
          %s401 = int_to_ptr.vmem [resolvable:$true] %s400
          %403 = dma.hbm_to_vmem [thread:$0]  %s3, 16, %s401, [#allocation9]
        $region20: #{tpu_custom_call.1} parent=11 // pred_fallthru
          _
        // Predicated region
        $region21: #{tpu_custom_call.1} parent=11 // pred_check
          %p404 = pneg %p150
        $region22: #{tpu_custom_call.1} parent=11 // pred_check_branch
          %406 = sbr.rel (%p404) target = $region24
        $region23: #{tpu_custom_call.1} parent=11 // pred_region
          %s408 = ssub.s32 256, 256
          %409 = vsyncadd [#allocation9], %s408
          %s410 = sshll.u32 [#allocation10], 4
          %s411 = int_to_ptr.vmem [resolvable:$true] %s410
          %416 = dma.hbm_to_vmem [thread:$0]  %s4, 256, %s411, [#allocation9], 64, 64, 4
        $region24: #{tpu_custom_call.1} parent=11 // pred_fallthru
          _
        // Predicated region
        $region25: #{tpu_custom_call.1} parent=11 // pred_check
          %p417 = pneg %p171
        $region26: #{tpu_custom_call.1} parent=11 // pred_check_branch
          %419 = sbr.rel (%p417) target = $region28
        $region27: #{tpu_custom_call.1} parent=11 // pred_region
          %s421 = ssub.s32 16, 16
          %422 = vsyncadd [#allocation12], %s421
          %s424 = sshll.u32 [#allocation11], 4
          %s425 = int_to_ptr.vmem [resolvable:$true] %s424
          %427 = dma.hbm_to_vmem [thread:$0]  %s5, 16, %s425, [#allocation12]
        $region28: #{tpu_custom_call.1} parent=11 // pred_fallthru
          _
        // Predicated region
        $region29: #{tpu_custom_call.1} parent=11 // pred_check
          %p428 = pneg %p192
        $region30: #{tpu_custom_call.1} parent=11 // pred_check_branch
          %430 = sbr.rel (%p428) target = $region32
        $region31: #{tpu_custom_call.1} parent=11 // pred_region
          %s432 = ssub.s32 16, 16
          %433 = vsyncadd [#allocation12], %s432
          %s435 = sshll.u32 [#allocation13], 4
          %s436 = int_to_ptr.vmem [resolvable:$true] %s435
          %438 = dma.hbm_to_vmem [thread:$0]  %s6, 16, %s436, [#allocation12]
        $region32: #{tpu_custom_call.1} parent=11 // pred_fallthru
          _
        // Predicated region
        $region33: #{tpu_custom_call.1} parent=11 // pred_check
          %p439 = pneg %p213
        $region34: #{tpu_custom_call.1} parent=11 // pred_check_branch
          %441 = sbr.rel (%p439) target = $region36
        $region35: #{tpu_custom_call.1} parent=11 // pred_region
          %s443 = ssub.s32 16, 16
          %444 = vsyncadd [#allocation15], %s443
          %s446 = sshll.u32 [#allocation14], 4
          %s447 = int_to_ptr.vmem [resolvable:$true] %s446
          %449 = dma.hbm_to_vmem [thread:$0]  %s7, 16, %s447, [#allocation15]
        $region36: #{tpu_custom_call.1} parent=11 // pred_fallthru
          _
        // Predicated region
        $region37: #{tpu_custom_call.1} parent=11 // pred_check
          %p450 = pneg %p234
        $region38: #{tpu_custom_call.1} parent=11 // pred_check_branch
          %452 = sbr.rel (%p450) target = $region40
        $region39: #{tpu_custom_call.1} parent=11 // pred_region
          %s454 = ssub.s32 256, 256
          %455 = vsyncadd [#allocation15], %s454
          %s456 = sshll.u32 [#allocation16], 4
          %s457 = int_to_ptr.vmem [resolvable:$true] %s456
          %462 = dma.hbm_to_vmem [thread:$0]  %s8, 256, %s457, [#allocation15], 64, 64, 4
        $region40: #{tpu_custom_call.1} parent=11 // pred_fallthru
          _
        // Predicated region
        $region41: #{tpu_custom_call.1} parent=11 // pred_check
          %p463 = pneg %p255
        $region42: #{tpu_custom_call.1} parent=11 // pred_check_branch
          %465 = sbr.rel (%p463) target = $region44
        $region43: #{tpu_custom_call.1} parent=11 // pred_region
          %s467 = ssub.s32 16, 16
          %468 = vsyncadd [#allocation18], %s467
          %s470 = sshll.u32 [#allocation17], 4
          %s471 = int_to_ptr.vmem [resolvable:$true] %s470
          %473 = dma.hbm_to_vmem [thread:$0]  %s9, 16, %s471, [#allocation18]
        $region44: #{tpu_custom_call.1} parent=11 // pred_fallthru
          _
        // Predicated region
        $region45: #{tpu_custom_call.1} parent=11 // pred_check
          %p474 = pneg %p276
        $region46: #{tpu_custom_call.1} parent=11 // pred_check_branch
          %476 = sbr.rel (%p474) target = $region48
        $region47: #{tpu_custom_call.1} parent=11 // pred_region
          %s478 = ssub.s32 1024, 1024
          %479 = vsyncadd [#allocation18], %s478
          %s480 = sshll.u32 [#allocation19], 4
          %s481 = int_to_ptr.vmem [resolvable:$true] %s480
          %486 = dma.hbm_to_vmem [thread:$0]  %s10, 1024, %s481, [#allocation18], 64, 64, 4
        $region48: #{tpu_custom_call.1} parent=11 // pred_fallthru
          _
        // Predicated region
        $region49: #{tpu_custom_call.1} parent=11 // pred_check
          %p487 = pneg %p297
        $region50: #{tpu_custom_call.1} parent=11 // pred_check_branch
          %489 = sbr.rel (%p487) target = $region52
        $region51: #{tpu_custom_call.1} parent=11 // pred_region
          %s491 = ssub.s32 16, 16
          %492 = vsyncadd [#allocation21], %s491
          %s494 = sshll.u32 [#allocation20], 4
          %s495 = int_to_ptr.vmem [resolvable:$true] %s494
          %497 = dma.hbm_to_vmem [thread:$0]  %s11, 16, %s495, [#allocation21]
        $region52: #{tpu_custom_call.1} parent=11 // pred_fallthru
          _
        // Predicated region
        $region53: #{tpu_custom_call.1} parent=11 // pred_check
          %p498 = pneg %p318
        $region54: #{tpu_custom_call.1} parent=11 // pred_check_branch
          %500 = sbr.rel (%p498) target = $region56
        $region55: #{tpu_custom_call.1} parent=11 // pred_region
          %s502 = ssub.s32 16, 16
          %503 = vsyncadd [#allocation21], %s502
          %s505 = sshll.u32 [#allocation22], 4
          %s506 = int_to_ptr.vmem [resolvable:$true] %s505
          %508 = dma.hbm_to_vmem [thread:$0]  %s12, 16, %s506, [#allocation21]
        $region56: #{tpu_custom_call.1} parent=11 // pred_fallthru
          _
        // Predicated region
        $region57: #{tpu_custom_call.1} parent=11 // pred_check
          %p509 = pneg %p339
        $region58: #{tpu_custom_call.1} parent=11 // pred_check_branch
          %511 = sbr.rel (%p509) target = $region60
        $region59: #{tpu_custom_call.1} parent=11 // pred_region
          %s513 = ssub.s32 16, 16
          %514 = vsyncadd [#allocation24], %s513
          %s516 = sshll.u32 [#allocation23], 4
          %s517 = int_to_ptr.vmem [resolvable:$true] %s516
          %519 = dma.hbm_to_vmem [thread:$0]  %s13, 16, %s517, [#allocation24]
        $region60: #{tpu_custom_call.1} parent=11 // pred_fallthru
          _
      $region12: #{tpu_custom_call.1} parent=5 // pred_fallthru
        _
      %p520 = scmp.lt.s32.totalorder %s35, 2
      // Predicated region
      $region61: #{tpu_custom_call.1} parent=5 // pred_check
        %p521 = pneg %p520
      $region62: #{tpu_custom_call.1} parent=5 // pred_check_branch
        %523 = sbr.rel (%p521) target = $region64
      $region63: #{tpu_custom_call.1} parent=5 // pred_region
        // Predicated region
        $region65: #{tpu_custom_call.1} parent=63 // pred_check
          %p524 = pneg %p55
        $region66: #{tpu_custom_call.1} parent=63 // pred_check_branch
          %526 = sbr.rel (%p524) target = $region68
        $region67: #{tpu_custom_call.1} parent=63 // pred_region
          %s527 = sand.u32 %s45, 1
          %s528 = scalar_lea.sflag [#allocation3], %s527
          %s529 = sand.u32 %s45, 1
          %s530 = smul.addr %s529, 8
          %s531 = scalar_lea.vmem [#allocation2], %s530
          %s533 = ssub.s32 128, 128
          %534 = vsyncadd %s528, %s533
          %s535 = smul.addr %s35, 128
          %s536 = scalar_lea.hbm %s0, %s535
          %s538 = sshll.u32 %s531, 4
          %s539 = int_to_ptr.vmem [resolvable:$true] %s538
          %541 = dma.hbm_to_vmem [thread:$0]  %s536, 128, %s539, %s528
        $region68: #{tpu_custom_call.1} parent=63 // pred_fallthru
          _
        // Predicated region
        $region69: #{tpu_custom_call.1} parent=63 // pred_check
          %p542 = pneg %p81
        $region70: #{tpu_custom_call.1} parent=63 // pred_check_branch
          %544 = sbr.rel (%p542) target = $region72
        $region71: #{tpu_custom_call.1} parent=63 // pred_region
          %s545 = sand.u32 %s35, 1
          %s546 = scalar_lea.sflag [#allocation6], %s545
          %s547 = sand.u32 %s71, 1
          %s548 = scalar_lea.vmem [#allocation5], %s547
          %s550 = ssub.s32 16, 16
          %551 = vsyncadd %s546, %s550
          %s552 = smul.addr %s35, 16
          %s553 = scalar_lea.hbm %s1, %s552
          %s555 = sshll.u32 %s548, 4
          %s556 = int_to_ptr.vmem [resolvable:$true] %s555
          %558 = dma.hbm_to_vmem [thread:$0]  %s553, 16, %s556, %s546
        $region72: #{tpu_custom_call.1} parent=63 // pred_fallthru
          _
      $region64: #{tpu_custom_call.1} parent=5 // pred_fallthru
        _
      %p559 = scmp.le.s32.totalorder 1, %s35
      %p560 = scmp.lt.s32.totalorder %s35, 3
      %p561 = pnand %p559, %p560
      %p562 = pneg %p561
      // Predicated region
      $region73: #{tpu_custom_call.1} parent=5 // pred_check
        _
      $region74: #{tpu_custom_call.1} parent=5 // pred_check_branch
        %564 = sbr.rel (%p561) target = $region76
      $region75: #{tpu_custom_call.1} parent=5 // pred_region
        %s565 = ssub.s32 %s35, 1
        %s566 = sand.u32 %s48, 1
        %s567 = scalar_lea.sflag [#allocation3], %s566
        %s568 = sand.u32 %s48, 1
        %s569 = smul.addr %s568, 8
        %s570 = scalar_lea.vmem [#allocation2], %s569
        // Predicated region
        $region77: #{tpu_custom_call.1} parent=75 // pred_check
          %p571 = pneg %p61
        $region78: #{tpu_custom_call.1} parent=75 // pred_check_branch
          %573 = sbr.rel (%p571) target = $region80
        $region79: #{tpu_custom_call.1} parent=75 // pred_region
          %574 = dma.done %s567, 128
        $region80: #{tpu_custom_call.1} parent=75 // pred_fallthru
          _
        %s575 = sand.u32 %s40, 1
        %s576 = scalar_lea.sflag [#allocation6], %s575
        %s577 = sand.u32 %s74, 1
        %s578 = scalar_lea.vmem [#allocation5], %s577
        // Predicated region
        $region81: #{tpu_custom_call.1} parent=75 // pred_check
          %p579 = pneg %p87
        $region82: #{tpu_custom_call.1} parent=75 // pred_check_branch
          %581 = sbr.rel (%p579) target = $region84
        $region83: #{tpu_custom_call.1} parent=75 // pred_region
          %582 = dma.done %s576, 16
        $region84: #{tpu_custom_call.1} parent=75 // pred_fallthru
          _
        // Predicated region
        $region85: #{tpu_custom_call.1} parent=75 // pred_check
          %p583 = pneg %p108
        $region86: #{tpu_custom_call.1} parent=75 // pred_check_branch
          %585 = sbr.rel (%p583) target = $region88
        $region87: #{tpu_custom_call.1} parent=75 // pred_region
          %586 = dma.done [#allocation6], 256
        $region88: #{tpu_custom_call.1} parent=75 // pred_fallthru
          _
        // Predicated region
        $region89: #{tpu_custom_call.1} parent=75 // pred_check
          %p587 = pneg %p129
        $region90: #{tpu_custom_call.1} parent=75 // pred_check_branch
          %589 = sbr.rel (%p587) target = $region92
        $region91: #{tpu_custom_call.1} parent=75 // pred_region
          %590 = dma.done [#allocation9], 16
        $region92: #{tpu_custom_call.1} parent=75 // pred_fallthru
          _
        // Predicated region
        $region93: #{tpu_custom_call.1} parent=75 // pred_check
          %p591 = pneg %p150
        $region94: #{tpu_custom_call.1} parent=75 // pred_check_branch
          %593 = sbr.rel (%p591) target = $region96
        $region95: #{tpu_custom_call.1} parent=75 // pred_region
          %594 = dma.done [#allocation9], 256
        $region96: #{tpu_custom_call.1} parent=75 // pred_fallthru
          _
        // Predicated region
        $region97: #{tpu_custom_call.1} parent=75 // pred_check
          %p595 = pneg %p171
        $region98: #{tpu_custom_call.1} parent=75 // pred_check_branch
          %597 = sbr.rel (%p595) target = $region100
        $region99: #{tpu_custom_call.1} parent=75 // pred_region
          %598 = dma.done [#allocation12], 16
        $region100: #{tpu_custom_call.1} parent=75 // pred_fallthru
          _
        // Predicated region
        $region101: #{tpu_custom_call.1} parent=75 // pred_check
          %p599 = pneg %p192
        $region102: #{tpu_custom_call.1} parent=75 // pred_check_branch
          %601 = sbr.rel (%p599) target = $region104
        $region103: #{tpu_custom_call.1} parent=75 // pred_region
          %602 = dma.done [#allocation12], 16
        $region104: #{tpu_custom_call.1} parent=75 // pred_fallthru
          _
        // Predicated region
        $region105: #{tpu_custom_call.1} parent=75 // pred_check
          %p603 = pneg %p213
        $region106: #{tpu_custom_call.1} parent=75 // pred_check_branch
          %605 = sbr.rel (%p603) target = $region108
        $region107: #{tpu_custom_call.1} parent=75 // pred_region
          %606 = dma.done [#allocation15], 16
        $region108: #{tpu_custom_call.1} parent=75 // pred_fallthru
          _
        // Predicated region
        $region109: #{tpu_custom_call.1} parent=75 // pred_check
          %p607 = pneg %p234
        $region110: #{tpu_custom_call.1} parent=75 // pred_check_branch
          %609 = sbr.rel (%p607) target = $region112
        $region111: #{tpu_custom_call.1} parent=75 // pred_region
          %610 = dma.done [#allocation15], 256
        $region112: #{tpu_custom_call.1} parent=75 // pred_fallthru
          _
        // Predicated region
        $region113: #{tpu_custom_call.1} parent=75 // pred_check
          %p611 = pneg %p255
        $region114: #{tpu_custom_call.1} parent=75 // pred_check_branch
          %613 = sbr.rel (%p611) target = $region116
        $region115: #{tpu_custom_call.1} parent=75 // pred_region
          %614 = dma.done [#allocation18], 16
        $region116: #{tpu_custom_call.1} parent=75 // pred_fallthru
          _
        // Predicated region
        $region117: #{tpu_custom_call.1} parent=75 // pred_check
          %p615 = pneg %p276
        $region118: #{tpu_custom_call.1} parent=75 // pred_check_branch
          %617 = sbr.rel (%p615) target = $region120
        $region119: #{tpu_custom_call.1} parent=75 // pred_region
          %618 = dma.done [#allocation18], 1024
        $region120: #{tpu_custom_call.1} parent=75 // pred_fallthru
          _
        // Predicated region
        $region121: #{tpu_custom_call.1} parent=75 // pred_check
          %p619 = pneg %p297
        $region122: #{tpu_custom_call.1} parent=75 // pred_check_branch
          %621 = sbr.rel (%p619) target = $region124
        $region123: #{tpu_custom_call.1} parent=75 // pred_region
          %622 = dma.done [#allocation21], 16
        $region124: #{tpu_custom_call.1} parent=75 // pred_fallthru
          _
        // Predicated region
        $region125: #{tpu_custom_call.1} parent=75 // pred_check
          %p623 = pneg %p318
        $region126: #{tpu_custom_call.1} parent=75 // pred_check_branch
          %625 = sbr.rel (%p623) target = $region128
        $region127: #{tpu_custom_call.1} parent=75 // pred_region
          %626 = dma.done [#allocation21], 16
        $region128: #{tpu_custom_call.1} parent=75 // pred_fallthru
          _
        // Predicated region
        $region129: #{tpu_custom_call.1} parent=75 // pred_check
          %p627 = pneg %p339
        $region130: #{tpu_custom_call.1} parent=75 // pred_check_branch
          %629 = sbr.rel (%p627) target = $region132
        $region131: #{tpu_custom_call.1} parent=75 // pred_region
          %630 = dma.done [#allocation24], 16
        $region132: #{tpu_custom_call.1} parent=75 // pred_fallthru
          _
        %s631 = sand.u32 %s48, 1
        %s632 = scalar_lea.sflag [#allocation3], %s631
        %s633 = sand.u32 %s48, 1
        %s634 = smul.addr %s633, 8
        %s635 = scalar_lea.vmem [#allocation2], %s634
        %p636 = pneg %p61
        %p637 = pneg %p58
        %s638 = sand.u32 %s40, 1
        %s639 = scalar_lea.sflag [#allocation6], %s638
        %s640 = sand.u32 %s74, 1
        %s641 = scalar_lea.vmem [#allocation5], %s640
        %p642 = pneg %p87
        %p643 = pneg %p84
        %p644 = pneg %p108
        %p645 = pneg %p105
        %p646 = pneg %p129
        %p647 = pneg %p126
        %p648 = pneg %p150
        %p649 = pneg %p147
        %p650 = pneg %p171
        %p651 = pneg %p168
        %p652 = pneg %p192
        %p653 = pneg %p189
        %p654 = pneg %p213
        %p655 = pneg %p210
        %p656 = pneg %p234
        %p657 = pneg %p231
        %p658 = pneg %p255
        %p659 = pneg %p252
        %p660 = pneg %p276
        %p661 = pneg %p273
        %p662 = pneg %p297
        %p663 = pneg %p294
        %p664 = pneg %p318
        %p665 = pneg %p315
        %p666 = pneg %p339
        %p667 = pneg %p336
        %p668 = pneg %p365
        %p669 = pneg %p362
        %s670 = sand.u32 %s352, 1
        %s671 = scalar_lea.sflag [#allocation4], %s670
        %s672 = sand.u32 %s352, 1
        %s673 = smul.addr %s672, 8
        %s674 = scalar_lea.vmem [#allocation25], %s673
        %v676 = vld [vmem:[%s570] sm:$0xff]
        %v677 = vpack.c.bf16 %v676, %v676
        %v678 = vld [vmem:[#allocation7] sm:$0xf]
        %v679 = vld [vmem:[#allocation7 + $0x4] sm:$0xf]
        %v680 = vld [vmem:[#allocation7 + $0x8] sm:$0xf]
        %v681 = vld [vmem:[#allocation7 + $0xc] sm:$0xf]
        %v682 = vld [vmem:[#allocation8] sm:$0x1]
        %v684 = vlaneseq
        %v685 = vshrl.u32 %v684, 7
        %v686 = vsub.s32 0, %v685
        %v687 = vrot.slane %v682, %v686
        %v693 = vunpack.c.l.b16 %v678
        %v694 = vunpack.c.l.b16 %v679
        %v695 = vunpack.c.l.b16 %v680
        %v696 = vunpack.c.l.b16 %v681
        %v697 = vpack.c.b16 %v694, %v693
        %v698 = vpack.c.b16 %v696, %v695
        %vm701 = vcmask 261120
        %v703 = vsel %vm701, %v677, 0
        %705 = vmatprep.subr.bf16.mxu0 0
        %706 = vmatpush1.bf16.msra.mxu0 %v697
        %707 = vmatprep.subr.bf16.mxu0 0
        %708 = vmatpush1.bf16.msra.mxu0 %v698
        %709 = vmatprep.subr.bf16.mxu0 0
        %710 = vmatpush1.bf16.msra.mxu0 0
        %711 = vmatprep.subr.bf16.mxu0 0
        %712 = vmatpush1.bf16.msra.mxu0 0
        %713 = vmatprep.subr.bf16.mxu0 0
        %714 = vmatpush1.bf16.msra.mxu0 0
        %715 = vmatprep.subr.bf16.mxu0 0
        %716 = vmatpush1.bf16.msra.mxu0 0
        %717 = vmatprep.subr.bf16.mxu0 0
        %718 = vmatpush1.bf16.msra.mxu0 0
        %719 = vmatprep.subr.bf16.mxu0 0
        %720 = vmatpush1.bf16.msra.mxu0 0
        %721 = vmatprep.subr.bf16.mxu0 0
        %722 = vmatpush1.bf16.msra.mxu0 0
        %723 = vmatprep.subr.bf16.mxu0 0
        %724 = vmatpush1.bf16.msra.mxu0 0
        %725 = vmatprep.subr.bf16.mxu0 0
        %726 = vmatpush1.bf16.msra.mxu0 0
        %727 = vmatprep.subr.bf16.mxu0 0
        %728 = vmatpush1.bf16.msra.mxu0 0
        %729 = vmatprep.subr.bf16.mxu0 0
        %730 = vmatpush1.bf16.msra.mxu0 0
        %731 = vmatprep.subr.bf16.mxu0 0
        %732 = vmatpush1.bf16.msra.mxu0 0
        %733 = vmatprep.subr.bf16.mxu0 0
        %734 = vmatpush1.bf16.msra.mxu0 0
        %735 = vmatprep.subr.bf16.mxu0 0
        %736 = vmatpush1.bf16.msra.mxu0 0
        %737 = vmatprep.mubr.bf16.mxu0 0
        %738 = vmatmul.mubr.bf16.gmra.mrb[0].mxu0 %v703
        %v739 = vpop.f32.mrb[0].mxu0
        %v740 = vadd.f32 %v687, %v739
        %v741 = vpop.f32.mrb[0].mxu0
        %v742 = vpop.f32.mrb[0].mxu0
        %v743 = vpop.f32.mrb[0].mxu0
        %744 = vdwg.mxu0
        %746 = vrot.lane.b32.xlu0 %v740, 120
        %v747 = vpop.permute.xlu0 %746
        %749 = vrot.lane.b32.xlu0 %v740, 112
        %v750 = vpop.permute.xlu0 %749
        %752 = vrot.lane.b32.xlu0 %v740, 104
        %v753 = vpop.permute.xlu0 %752
        %v755 = vcombine.low %v740, %v750
        %v756 = vcombine.high %v740, %v750
        %v758 = vunpack.c.l.s4 1983009808
        %v759 = vunpack.c.0.s8 %v758
        %v760 = vlaneseq
        %v761 = vshrl.u32 %v760, 7
        %v762 = vsub.s32 %v759, %v761
        %v763 = vrot.slane %v755, %v762
        %v765 = vunpack.c.l.s4 1983009808
        %v766 = vunpack.c.0.s8 %v765
        %v767 = vlaneseq
        %v768 = vshrl.u32 %v767, 7
        %v769 = vsub.s32 %v766, %v768
        %v770 = vrot.slane %v756, %v769
        %v771 = vcombine.low %v747, %v753
        %v772 = vcombine.high %v747, %v753
        %v774 = vunpack.c.l.s4 1983009808
        %v775 = vunpack.c.0.s8 %v774
        %v776 = vlaneseq
        %v777 = vshrl.u32 %v776, 7
        %v778 = vsub.s32 %v775, %v777
        %v779 = vrot.slane %v771, %v778
        %v781 = vunpack.c.l.s4 1983009808
        %v782 = vunpack.c.0.s8 %v781
        %v783 = vlaneseq
        %v784 = vshrl.u32 %v783, 7
        %v785 = vsub.s32 %v782, %v784
        %v786 = vrot.slane %v772, %v785
        %v787 = vcombine.low %v763, %v779
        %v788 = vcombine.high %v763, %v779
        %v790 = vunpack.c.l.s4 1934713408
        %v791 = vunpack.c.0.s8 %v790
        %v792 = vlaneseq
        %v793 = vshrl.u32 %v792, 7
        %v794 = vsub.s32 %v791, %v793
        %v795 = vrot.slane %v787, %v794
        %v797 = vunpack.c.l.s4 1934713408
        %v798 = vunpack.c.0.s8 %v797
        %v799 = vlaneseq
        %v800 = vshrl.u32 %v799, 7
        %v801 = vsub.s32 %v798, %v800
        %v802 = vrot.slane %v788, %v801
        %v803 = vcombine.low %v770, %v786
        %v804 = vcombine.high %v770, %v786
        %v806 = vunpack.c.l.s4 1934713408
        %v807 = vunpack.c.0.s8 %v806
        %v808 = vlaneseq
        %v809 = vshrl.u32 %v808, 7
        %v810 = vsub.s32 %v807, %v809
        %v811 = vrot.slane %v803, %v810
        %v813 = vunpack.c.l.s4 1934713408
        %v814 = vunpack.c.0.s8 %v813
        %v815 = vlaneseq
        %v816 = vshrl.u32 %v815, 7
        %v817 = vsub.s32 %v814, %v816
        %v818 = vrot.slane %v804, %v817
        %v819 = vcombine.high %v795, 0.0
        %v820 = vcombine.high %v802, 0.0
        %v821 = vcombine.high %v811, 0.0
        %v822 = vcombine.high %v818, 0.0
        %v823 = vcombine.low %v795, %v802
        %v825 = vunpack.c.l.s4 1983009808
        %v826 = vunpack.c.0.s8 %v825
        %v827 = vlaneseq
        %v828 = vshrl.u32 %v827, 7
        %v829 = vsub.s32 %v826, %v828
        %v830 = vrot.slane %v823, %v829
        %v831 = vcombine.low %v819, %v820
        %v833 = vunpack.c.l.s4 1983009808
        %v834 = vunpack.c.0.s8 %v833
        %v835 = vlaneseq
        %v836 = vshrl.u32 %v835, 7
        %v837 = vsub.s32 %v834, %v836
        %v838 = vrot.slane %v831, %v837
        %v839 = vcombine.low %v811, %v818
        %v841 = vunpack.c.l.s4 1983009808
        %v842 = vunpack.c.0.s8 %v841
        %v843 = vlaneseq
        %v844 = vshrl.u32 %v843, 7
        %v845 = vsub.s32 %v842, %v844
        %v846 = vrot.slane %v839, %v845
        %v847 = vcombine.low %v821, %v822
        %v849 = vunpack.c.l.s4 1983009808
        %v850 = vunpack.c.0.s8 %v849
        %v851 = vlaneseq
        %v852 = vshrl.u32 %v851, 7
        %v853 = vsub.s32 %v850, %v852
        %v854 = vrot.slane %v847, %v853
        %v855 = vcombine.low %v830, %v838
        %v856 = vcombine.high %v830, %v838
        %v858 = vunpack.c.l.s4 1934713408
        %v859 = vunpack.c.0.s8 %v858
        %v860 = vlaneseq
        %v861 = vshrl.u32 %v860, 7
        %v862 = vsub.s32 %v859, %v861
        %v863 = vrot.slane %v855, %v862
        %v865 = vunpack.c.l.s4 1934713408
        %v866 = vunpack.c.0.s8 %v865
        %v867 = vlaneseq
        %v868 = vshrl.u32 %v867, 7
        %v869 = vsub.s32 %v866, %v868
        %v870 = vrot.slane %v856, %v869
        %v871 = vcombine.low %v846, %v854
        %v872 = vcombine.high %v846, %v854
        %v874 = vunpack.c.l.s4 1934713408
        %v875 = vunpack.c.0.s8 %v874
        %v876 = vlaneseq
        %v877 = vshrl.u32 %v876, 7
        %v878 = vsub.s32 %v875, %v877
        %v879 = vrot.slane %v871, %v878
        %v881 = vunpack.c.l.s4 1934713408
        %v882 = vunpack.c.0.s8 %v881
        %v883 = vlaneseq
        %v884 = vshrl.u32 %v883, 7
        %v885 = vsub.s32 %v882, %v884
        %v886 = vrot.slane %v872, %v885
        %v887 = vcombine.low %v863, %v879
        %v888 = vcombine.high %v863, %v879
        %v889 = vcombine.low %v870, %v886
        %v890 = vcombine.high %v870, %v886
        %v891 = vpack.c.bf16 %v887, %v887
        %v892 = vpack.c.bf16 %v888, %v888
        %v893 = vpack.c.bf16 %v889, %v889
        %v894 = vpack.c.bf16 %v890, %v890
        %895 = vrot.lane.b32.xlu0 %v740, 96
        %v896 = vpop.permute.xlu0 %895
        %897 = vrot.lane.b32.xlu0 %v747, 96
        %v898 = vpop.permute.xlu0 %897
        %899 = vrot.lane.b32.xlu0 %v750, 96
        %v900 = vpop.permute.xlu0 %899
        %901 = vrot.lane.b32.xlu0 %v753, 96
        %v902 = vpop.permute.xlu0 %901
        %v907 = vcombine.low %v896, %v900
        %v908 = vcombine.high %v896, %v900
        %v910 = vunpack.c.l.s4 1983009808
        %v911 = vunpack.c.0.s8 %v910
        %v912 = vlaneseq
        %v913 = vshrl.u32 %v912, 7
        %v914 = vsub.s32 %v911, %v913
        %v915 = vrot.slane %v907, %v914
        %v917 = vunpack.c.l.s4 1983009808
        %v918 = vunpack.c.0.s8 %v917
        %v919 = vlaneseq
        %v920 = vshrl.u32 %v919, 7
        %v921 = vsub.s32 %v918, %v920
        %v922 = vrot.slane %v908, %v921
        %v923 = vcombine.low %v898, %v902
        %v924 = vcombine.high %v898, %v902
        %v926 = vunpack.c.l.s4 1983009808
        %v927 = vunpack.c.0.s8 %v926
        %v928 = vlaneseq
        %v929 = vshrl.u32 %v928, 7
        %v930 = vsub.s32 %v927, %v929
        %v931 = vrot.slane %v923, %v930
        %v933 = vunpack.c.l.s4 1983009808
        %v934 = vunpack.c.0.s8 %v933
        %v935 = vlaneseq
        %v936 = vshrl.u32 %v935, 7
        %v937 = vsub.s32 %v934, %v936
        %v938 = vrot.slane %v924, %v937
        %v939 = vcombine.low %v915, %v931
        %v940 = vcombine.high %v915, %v931
        %v942 = vunpack.c.l.s4 1934713408
        %v943 = vunpack.c.0.s8 %v942
        %v944 = vlaneseq
        %v945 = vshrl.u32 %v944, 7
        %v946 = vsub.s32 %v943, %v945
        %v947 = vrot.slane %v939, %v946
        %v949 = vunpack.c.l.s4 1934713408
        %v950 = vunpack.c.0.s8 %v949
        %v951 = vlaneseq
        %v952 = vshrl.u32 %v951, 7
        %v953 = vsub.s32 %v950, %v952
        %v954 = vrot.slane %v940, %v953
        %v955 = vcombine.low %v922, %v938
        %v956 = vcombine.high %v922, %v938
        %v958 = vunpack.c.l.s4 1934713408
        %v959 = vunpack.c.0.s8 %v958
        %v960 = vlaneseq
        %v961 = vshrl.u32 %v960, 7
        %v962 = vsub.s32 %v959, %v961
        %v963 = vrot.slane %v955, %v962
        %v965 = vunpack.c.l.s4 1934713408
        %v966 = vunpack.c.0.s8 %v965
        %v967 = vlaneseq
        %v968 = vshrl.u32 %v967, 7
        %v969 = vsub.s32 %v966, %v968
        %v970 = vrot.slane %v956, %v969
        %v971 = vcombine.high %v947, 0.0
        %v972 = vcombine.high %v954, 0.0
        %v973 = vcombine.high %v963, 0.0
        %v974 = vcombine.high %v970, 0.0
        %v975 = vcombine.low %v947, %v954
        %v977 = vunpack.c.l.s4 1983009808
        %v978 = vunpack.c.0.s8 %v977
        %v979 = vlaneseq
        %v980 = vshrl.u32 %v979, 7
        %v981 = vsub.s32 %v978, %v980
        %v982 = vrot.slane %v975, %v981
        %v983 = vcombine.low %v971, %v972
        %v985 = vunpack.c.l.s4 1983009808
        %v986 = vunpack.c.0.s8 %v985
        %v987 = vlaneseq
        %v988 = vshrl.u32 %v987, 7
        %v989 = vsub.s32 %v986, %v988
        %v990 = vrot.slane %v983, %v989
        %v991 = vcombine.low %v963, %v970
        %v993 = vunpack.c.l.s4 1983009808
        %v994 = vunpack.c.0.s8 %v993
        %v995 = vlaneseq
        %v996 = vshrl.u32 %v995, 7
        %v997 = vsub.s32 %v994, %v996
        %v998 = vrot.slane %v991, %v997
        %v999 = vcombine.low %v973, %v974
        %v1001 = vunpack.c.l.s4 1983009808
        %v1002 = vunpack.c.0.s8 %v1001
        %v1003 = vlaneseq
        %v1004 = vshrl.u32 %v1003, 7
        %v1005 = vsub.s32 %v1002, %v1004
        %v1006 = vrot.slane %v999, %v1005
        %v1007 = vcombine.low %v982, %v990
        %v1008 = vcombine.high %v982, %v990
        %v1010 = vunpack.c.l.s4 1934713408
        %v1011 = vunpack.c.0.s8 %v1010
        %v1012 = vlaneseq
        %v1013 = vshrl.u32 %v1012, 7
        %v1014 = vsub.s32 %v1011, %v1013
        %v1015 = vrot.slane %v1007, %v1014
        %v1017 = vunpack.c.l.s4 1934713408
        %v1018 = vunpack.c.0.s8 %v1017
        %v1019 = vlaneseq
        %v1020 = vshrl.u32 %v1019, 7
        %v1021 = vsub.s32 %v1018, %v1020
        %v1022 = vrot.slane %v1008, %v1021
        %v1023 = vcombine.low %v998, %v1006
        %v1024 = vcombine.high %v998, %v1006
        %v1026 = vunpack.c.l.s4 1934713408
        %v1027 = vunpack.c.0.s8 %v1026
        %v1028 = vlaneseq
        %v1029 = vshrl.u32 %v1028, 7
        %v1030 = vsub.s32 %v1027, %v1029
        %v1031 = vrot.slane %v1023, %v1030
        %v1033 = vunpack.c.l.s4 1934713408
        %v1034 = vunpack.c.0.s8 %v1033
        %v1035 = vlaneseq
        %v1036 = vshrl.u32 %v1035, 7
        %v1037 = vsub.s32 %v1034, %v1036
        %v1038 = vrot.slane %v1024, %v1037
        %v1039 = vcombine.low %v1015, %v1031
        %v1040 = vcombine.high %v1015, %v1031
        %v1041 = vcombine.low %v1022, %v1038
        %v1042 = vcombine.high %v1022, %v1038
        %v1043 = vpack.c.bf16 %v1039, %v1039
        %v1044 = vpack.c.bf16 %v1040, %v1040
        %v1045 = vpack.c.bf16 %v1041, %v1041
        %v1046 = vpack.c.bf16 %v1042, %v1042
        %1047 = vrot.lane.b32.xlu0 %v740, 64
        %v1048 = vpop.permute.xlu0 %1047
        %1049 = vrot.lane.b32.xlu0 %v747, 64
        %v1050 = vpop.permute.xlu0 %1049
        %1051 = vrot.lane.b32.xlu0 %v750, 64
        %v1052 = vpop.permute.xlu0 %1051
        %1053 = vrot.lane.b32.xlu0 %v753, 64
        %v1054 = vpop.permute.xlu0 %1053
        %v1059 = vcombine.low %v1048, %v1052
        %v1060 = vcombine.high %v1048, %v1052
        %v1062 = vunpack.c.l.s4 1983009808
        %v1063 = vunpack.c.0.s8 %v1062
        %v1064 = vlaneseq
        %v1065 = vshrl.u32 %v1064, 7
        %v1066 = vsub.s32 %v1063, %v1065
        %v1067 = vrot.slane %v1059, %v1066
        %v1069 = vunpack.c.l.s4 1983009808
        %v1070 = vunpack.c.0.s8 %v1069
        %v1071 = vlaneseq
        %v1072 = vshrl.u32 %v1071, 7
        %v1073 = vsub.s32 %v1070, %v1072
        %v1074 = vrot.slane %v1060, %v1073
        %v1075 = vcombine.low %v1050, %v1054
        %v1076 = vcombine.high %v1050, %v1054
        %v1078 = vunpack.c.l.s4 1983009808
        %v1079 = vunpack.c.0.s8 %v1078
        %v1080 = vlaneseq
        %v1081 = vshrl.u32 %v1080, 7
        %v1082 = vsub.s32 %v1079, %v1081
        %v1083 = vrot.slane %v1075, %v1082
        %v1085 = vunpack.c.l.s4 1983009808
        %v1086 = vunpack.c.0.s8 %v1085
        %v1087 = vlaneseq
        %v1088 = vshrl.u32 %v1087, 7
        %v1089 = vsub.s32 %v1086, %v1088
        %v1090 = vrot.slane %v1076, %v1089
        %v1091 = vcombine.low %v1067, %v1083
        %v1092 = vcombine.high %v1067, %v1083
        %v1094 = vunpack.c.l.s4 1934713408
        %v1095 = vunpack.c.0.s8 %v1094
        %v1096 = vlaneseq
        %v1097 = vshrl.u32 %v1096, 7
        %v1098 = vsub.s32 %v1095, %v1097
        %v1099 = vrot.slane %v1091, %v1098
        %v1101 = vunpack.c.l.s4 1934713408
        %v1102 = vunpack.c.0.s8 %v1101
        %v1103 = vlaneseq
        %v1104 = vshrl.u32 %v1103, 7
        %v1105 = vsub.s32 %v1102, %v1104
        %v1106 = vrot.slane %v1092, %v1105
        %v1107 = vcombine.low %v1074, %v1090
        %v1108 = vcombine.high %v1074, %v1090
        %v1110 = vunpack.c.l.s4 1934713408
        %v1111 = vunpack.c.0.s8 %v1110
        %v1112 = vlaneseq
        %v1113 = vshrl.u32 %v1112, 7
        %v1114 = vsub.s32 %v1111, %v1113
        %v1115 = vrot.slane %v1107, %v1114
        %v1117 = vunpack.c.l.s4 1934713408
        %v1118 = vunpack.c.0.s8 %v1117
        %v1119 = vlaneseq
        %v1120 = vshrl.u32 %v1119, 7
        %v1121 = vsub.s32 %v1118, %v1120
        %v1122 = vrot.slane %v1108, %v1121
        %v1123 = vcombine.high %v1099, 0.0
        %v1124 = vcombine.high %v1106, 0.0
        %v1125 = vcombine.high %v1115, 0.0
        %v1126 = vcombine.high %v1122, 0.0
        %v1127 = vcombine.low %v1099, %v1106
        %v1129 = vunpack.c.l.s4 1983009808
        %v1130 = vunpack.c.0.s8 %v1129
        %v1131 = vlaneseq
        %v1132 = vshrl.u32 %v1131, 7
        %v1133 = vsub.s32 %v1130, %v1132
        %v1134 = vrot.slane %v1127, %v1133
        %v1135 = vcombine.low %v1123, %v1124
        %v1137 = vunpack.c.l.s4 1983009808
        %v1138 = vunpack.c.0.s8 %v1137
        %v1139 = vlaneseq
        %v1140 = vshrl.u32 %v1139, 7
        %v1141 = vsub.s32 %v1138, %v1140
        %v1142 = vrot.slane %v1135, %v1141
        %v1143 = vcombine.low %v1115, %v1122
        %v1145 = vunpack.c.l.s4 1983009808
        %v1146 = vunpack.c.0.s8 %v1145
        %v1147 = vlaneseq
        %v1148 = vshrl.u32 %v1147, 7
        %v1149 = vsub.s32 %v1146, %v1148
        %v1150 = vrot.slane %v1143, %v1149
        %v1151 = vcombine.low %v1125, %v1126
        %v1153 = vunpack.c.l.s4 1983009808
        %v1154 = vunpack.c.0.s8 %v1153
        %v1155 = vlaneseq
        %v1156 = vshrl.u32 %v1155, 7
        %v1157 = vsub.s32 %v1154, %v1156
        %v1158 = vrot.slane %v1151, %v1157
        %v1159 = vcombine.low %v1134, %v1142
        %v1160 = vcombine.high %v1134, %v1142
        %v1162 = vunpack.c.l.s4 1934713408
        %v1163 = vunpack.c.0.s8 %v1162
        %v1164 = vlaneseq
        %v1165 = vshrl.u32 %v1164, 7
        %v1166 = vsub.s32 %v1163, %v1165
        %v1167 = vrot.slane %v1159, %v1166
        %v1169 = vunpack.c.l.s4 1934713408
        %v1170 = vunpack.c.0.s8 %v1169
        %v1171 = vlaneseq
        %v1172 = vshrl.u32 %v1171, 7
        %v1173 = vsub.s32 %v1170, %v1172
        %v1174 = vrot.slane %v1160, %v1173
        %v1175 = vcombine.low %v1150, %v1158
        %v1176 = vcombine.high %v1150, %v1158
        %v1178 = vunpack.c.l.s4 1934713408
        %v1179 = vunpack.c.0.s8 %v1178
        %v1180 = vlaneseq
        %v1181 = vshrl.u32 %v1180, 7
        %v1182 = vsub.s32 %v1179, %v1181
        %v1183 = vrot.slane %v1175, %v1182
        %v1185 = vunpack.c.l.s4 1934713408
        %v1186 = vunpack.c.0.s8 %v1185
        %v1187 = vlaneseq
        %v1188 = vshrl.u32 %v1187, 7
        %v1189 = vsub.s32 %v1186, %v1188
        %v1190 = vrot.slane %v1176, %v1189
        %v1191 = vcombine.low %v1167, %v1183
        %v1192 = vcombine.high %v1167, %v1183
        %v1193 = vcombine.low %v1174, %v1190
        %v1194 = vcombine.high %v1174, %v1190
        %v1195 = vpack.c.bf16 %v1191, %v1191
        %v1196 = vpack.c.bf16 %v1192, %v1192
        %v1197 = vpack.c.bf16 %v1193, %v1193
        %v1198 = vpack.c.bf16 %v1194, %v1194
        %vm1199 = vcmask 64512
        %v1201 = vsel %vm1199, %v891, 0
        %v1204 = vsel %vm1199, %v1043, 0
        %1206 = vmatprep.subr.bf16.mxu0 0
        %1207 = vmatpush1.bf16.xpose.msra.mxu0 %v1204
        %1208 = vmatprep.subr.bf16.mxu0 0
        %1209 = vmatpush1.bf16.xpose.msra.mxu0 0
        %1210 = vmatprep.subr.bf16.mxu0 0
        %1211 = vmatpush1.bf16.xpose.msra.mxu0 0
        %1212 = vmatprep.subr.bf16.mxu0 0
        %1213 = vmatpush1.bf16.xpose.msra.mxu0 0
        %1214 = vmatprep.subr.bf16.mxu0 0
        %1215 = vmatpush1.bf16.xpose.msra.mxu0 0
        %1216 = vmatprep.subr.bf16.mxu0 0
        %1217 = vmatpush1.bf16.xpose.msra.mxu0 0
        %1218 = vmatprep.subr.bf16.mxu0 0
        %1219 = vmatpush1.bf16.xpose.msra.mxu0 0
        %1220 = vmatprep.subr.bf16.mxu0 0
        %1221 = vmatpush1.bf16.xpose.msra.mxu0 0
        %1222 = vmatprep.subr.bf16.mxu0 0
        %1223 = vmatpush1.bf16.xpose.msra.mxu0 0
        %1224 = vmatprep.subr.bf16.mxu0 0
        %1225 = vmatpush1.bf16.xpose.msra.mxu0 0
        %1226 = vmatprep.subr.bf16.mxu0 0
        %1227 = vmatpush1.bf16.xpose.msra.mxu0 0
        %1228 = vmatprep.subr.bf16.mxu0 0
        %1229 = vmatpush1.bf16.xpose.msra.mxu0 0
        %1230 = vmatprep.subr.bf16.mxu0 0
        %1231 = vmatpush1.bf16.xpose.msra.mxu0 0
        %1232 = vmatprep.subr.bf16.mxu0 0
        %1233 = vmatpush1.bf16.xpose.msra.mxu0 0
        %1234 = vmatprep.subr.bf16.mxu0 0
        %1235 = vmatpush1.bf16.xpose.msra.mxu0 0
        %1236 = vmatprep.subr.bf16.mxu0 0
        %1237 = vmatpush1.bf16.xpose.msra.mxu0 0
        %1238 = vmatprep.mubr.bf16.mxu0 0
        %1239 = vmatmul.mubr.bf16.gmra.mrb[0].mxu0 %v1201
        %v1240 = vpop.f32.mrb[0].mxu0
        %v1241 = vadd.f32 0.0, %v1240
        %v1242 = vpop.f32.mrb[0].mxu0
        %v1243 = vpop.f32.mrb[0].mxu0
        %v1244 = vpop.f32.mrb[0].mxu0
        %1245 = vdwg.mxu0
        %v1247 = vsel %vm1199, %v892, 0
        %v1250 = vsel %vm1199, %v1044, 0
        %1252 = vmatprep.subr.bf16.mxu0 0
        %1253 = vmatpush1.bf16.xpose.msra.mxu0 %v1250
        %1254 = vmatprep.subr.bf16.mxu0 0
        %1255 = vmatpush1.bf16.xpose.msra.mxu0 0
        %1256 = vmatprep.subr.bf16.mxu0 0
        %1257 = vmatpush1.bf16.xpose.msra.mxu0 0
        %1258 = vmatprep.subr.bf16.mxu0 0
        %1259 = vmatpush1.bf16.xpose.msra.mxu0 0
        %1260 = vmatprep.subr.bf16.mxu0 0
        %1261 = vmatpush1.bf16.xpose.msra.mxu0 0
        %1262 = vmatprep.subr.bf16.mxu0 0
        %1263 = vmatpush1.bf16.xpose.msra.mxu0 0
        %1264 = vmatprep.subr.bf16.mxu0 0
        %1265 = vmatpush1.bf16.xpose.msra.mxu0 0
        %1266 = vmatprep.subr.bf16.mxu0 0
        %1267 = vmatpush1.bf16.xpose.msra.mxu0 0
        %1268 = vmatprep.subr.bf16.mxu0 0
        %1269 = vmatpush1.bf16.xpose.msra.mxu0 0
        %1270 = vmatprep.subr.bf16.mxu0 0
        %1271 = vmatpush1.bf16.xpose.msra.mxu0 0
        %1272 = vmatprep.subr.bf16.mxu0 0
        %1273 = vmatpush1.bf16.xpose.msra.mxu0 0
        %1274 = vmatprep.subr.bf16.mxu0 0
        %1275 = vmatpush1.bf16.xpose.msra.mxu0 0
        %1276 = vmatprep.subr.bf16.mxu0 0
        %1277 = vmatpush1.bf16.xpose.msra.mxu0 0
        %1278 = vmatprep.subr.bf16.mxu0 0
        %1279 = vmatpush1.bf16.xpose.msra.mxu0 0
        %1280 = vmatprep.subr.bf16.mxu0 0
        %1281 = vmatpush1.bf16.xpose.msra.mxu0 0
        %1282 = vmatprep.subr.bf16.mxu0 0
        %1283 = vmatpush1.bf16.xpose.msra.mxu0 0
        %1284 = vmatprep.mubr.bf16.mxu0 0
        %1285 = vmatmul.mubr.bf16.gmra.mrb[0].mxu0 %v1247
        %v1286 = vpop.f32.mrb[0].mxu0
        %v1287 = vadd.f32 0.0, %v1286
        %v1288 = vpop.f32.mrb[0].mxu0
        %v1289 = vpop.f32.mrb[0].mxu0
        %v1290 = vpop.f32.mrb[0].mxu0
        %1291 = vdwg.mxu0
        %v1293 = vsel %vm1199, %v893, 0
        %v1296 = vsel %vm1199, %v1045, 0
        %1298 = vmatprep.subr.bf16.mxu0 0
        %1299 = vmatpush1.bf16.xpose.msra.mxu0 %v1296
        %1300 = vmatprep.subr.bf16.mxu0 0
        %1301 = vmatpush1.bf16.xpose.msra.mxu0 0
        %1302 = vmatprep.subr.bf16.mxu0 0
        %1303 = vmatpush1.bf16.xpose.msra.mxu0 0
        %1304 = vmatprep.subr.bf16.mxu0 0
        %1305 = vmatpush1.bf16.xpose.msra.mxu0 0
        %1306 = vmatprep.subr.bf16.mxu0 0
        %1307 = vmatpush1.bf16.xpose.msra.mxu0 0
        %1308 = vmatprep.subr.bf16.mxu0 0
        %1309 = vmatpush1.bf16.xpose.msra.mxu0 0
        %1310 = vmatprep.subr.bf16.mxu0 0
        %1311 = vmatpush1.bf16.xpose.msra.mxu0 0
        %1312 = vmatprep.subr.bf16.mxu0 0
        %1313 = vmatpush1.bf16.xpose.msra.mxu0 0
        %1314 = vmatprep.subr.bf16.mxu0 0
        %1315 = vmatpush1.bf16.xpose.msra.mxu0 0
        %1316 = vmatprep.subr.bf16.mxu0 0
        %1317 = vmatpush1.bf16.xpose.msra.mxu0 0
        %1318 = vmatprep.subr.bf16.mxu0 0
        %1319 = vmatpush1.bf16.xpose.msra.mxu0 0
        %1320 = vmatprep.subr.bf16.mxu0 0
        %1321 = vmatpush1.bf16.xpose.msra.mxu0 0
        %1322 = vmatprep.subr.bf16.mxu0 0
        %1323 = vmatpush1.bf16.xpose.msra.mxu0 0
        %1324 = vmatprep.subr.bf16.mxu0 0
        %1325 = vmatpush1.bf16.xpose.msra.mxu0 0
        %1326 = vmatprep.subr.bf16.mxu0 0
        %1327 = vmatpush1.bf16.xpose.msra.mxu0 0
        %1328 = vmatprep.subr.bf16.mxu0 0
        %1329 = vmatpush1.bf16.xpose.msra.mxu0 0
        %1330 = vmatprep.mubr.bf16.mxu0 0
        %1331 = vmatmul.mubr.bf16.gmra.mrb[0].mxu0 %v1293
        %v1332 = vpop.f32.mrb[0].mxu0
        %v1333 = vadd.f32 0.0, %v1332
        %v1334 = vpop.f32.mrb[0].mxu0
        %v1335 = vpop.f32.mrb[0].mxu0
        %v1336 = vpop.f32.mrb[0].mxu0
        %1337 = vdwg.mxu0
        %v1339 = vsel %vm1199, %v894, 0
        %v1342 = vsel %vm1199, %v1046, 0
        %1344 = vmatprep.subr.bf16.mxu0 0
        %1345 = vmatpush1.bf16.xpose.msra.mxu0 %v1342
        %1346 = vmatprep.subr.bf16.mxu0 0
        %1347 = vmatpush1.bf16.xpose.msra.mxu0 0
        %1348 = vmatprep.subr.bf16.mxu0 0
        %1349 = vmatpush1.bf16.xpose.msra.mxu0 0
        %1350 = vmatprep.subr.bf16.mxu0 0
        %1351 = vmatpush1.bf16.xpose.msra.mxu0 0
        %1352 = vmatprep.subr.bf16.mxu0 0
        %1353 = vmatpush1.bf16.xpose.msra.mxu0 0
        %1354 = vmatprep.subr.bf16.mxu0 0
        %1355 = vmatpush1.bf16.xpose.msra.mxu0 0
        %1356 = vmatprep.subr.bf16.mxu0 0
        %1357 = vmatpush1.bf16.xpose.msra.mxu0 0
        %1358 = vmatprep.subr.bf16.mxu0 0
        %1359 = vmatpush1.bf16.xpose.msra.mxu0 0
        %1360 = vmatprep.subr.bf16.mxu0 0
        %1361 = vmatpush1.bf16.xpose.msra.mxu0 0
        %1362 = vmatprep.subr.bf16.mxu0 0
        %1363 = vmatpush1.bf16.xpose.msra.mxu0 0
        %1364 = vmatprep.subr.bf16.mxu0 0
        %1365 = vmatpush1.bf16.xpose.msra.mxu0 0
        %1366 = vmatprep.subr.bf16.mxu0 0
        %1367 = vmatpush1.bf16.xpose.msra.mxu0 0
        %1368 = vmatprep.subr.bf16.mxu0 0
        %1369 = vmatpush1.bf16.xpose.msra.mxu0 0
        %1370 = vmatprep.subr.bf16.mxu0 0
        %1371 = vmatpush1.bf16.xpose.msra.mxu0 0
        %1372 = vmatprep.subr.bf16.mxu0 0
        %1373 = vmatpush1.bf16.xpose.msra.mxu0 0
        %1374 = vmatprep.subr.bf16.mxu0 0
        %1375 = vmatpush1.bf16.xpose.msra.mxu0 0
        %1376 = vmatprep.mubr.bf16.mxu0 0
        %1377 = vmatmul.mubr.bf16.gmra.mrb[0].mxu0 %v1339
        %v1378 = vpop.f32.mrb[0].mxu0
        %v1379 = vadd.f32 0.0, %v1378
        %v1380 = vpop.f32.mrb[0].mxu0
        %v1381 = vpop.f32.mrb[0].mxu0
        %v1382 = vpop.f32.mrb[0].mxu0
        %1383 = vdwg.mxu0
        %v1384 = vmul.f32 %v1241, 0.35355338
        %v1385 = vmul.f32 %v1287, 0.35355338
        %v1386 = vmul.f32 %v1333, 0.35355338
        %v1387 = vmul.f32 %v1379, 0.35355338
        %v1388 = vlaneseq
        %v1389 = vshrl.u32 %v1388, 7
        %v1390 = vlaneseq
        %v1391 = vand.u32 %v1390, 127
        %vm1392 = vcmp.le.s32.totalorder %v1391, %v1389
        %v1393 = vld [vmem:[%s578] sm:$0x1]
        %vm1394 = vcmp.gt.f32.partialorder %v1393, 0.5
        %v1395 = vsel %vm1394, 1, 0
        %v1396 = vlaneseq
        %v1397 = vshrl.u32 %v1396, 7
        %v1398 = vsub.s32 0, %v1397
        %v1399 = vrot.slane %v1395, %v1398
        %vm1400 = vcmp.eq.s32.totalorder %v1399, 1
        %vm1401 = vmand %vm1392, %vm1400
        %v1402 = vsel %vm1401, 1, 0
        %vm1403 = vcmp.eq.s32.totalorder %v1402, 1
        %v1404 = vsel %vm1403, %v1384, -10000.0
        %v1405 = vsel %vm1403, %v1385, -10000.0
        %v1406 = vsel %vm1403, %v1386, -10000.0
        %v1407 = vsel %vm1403, %v1387, -10000.0
        %v1408 = vsel %vm1199, %v1404, -inf
        %1409 = vmax.xlane.f32.xlu0 %v1408
        %v1410 = vpop.xlane.xlu0 %1409
        %v1411 = vsel %vm1199, %v1405, -inf
        %1412 = vmax.xlane.f32.xlu0 %v1411
        %v1413 = vpop.xlane.xlu0 %1412
        %v1414 = vsel %vm1199, %v1406, -inf
        %1415 = vmax.xlane.f32.xlu0 %v1414
        %v1416 = vpop.xlane.xlu0 %1415
        %v1417 = vsel %vm1199, %v1407, -inf
        %1418 = vmax.xlane.f32.xlu0 %v1417
        %v1419 = vpop.xlane.xlu0 %1418
        %v1420 = vsub.f32 %v1404, %v1410
        %v1421 = vsub.f32 %v1405, %v1413
        %v1422 = vsub.f32 %v1406, %v1416
        %v1423 = vsub.f32 %v1407, %v1419
        %v1424 = vmul.f32 %v1420, 1.442695
        %v1425 = vpow.pop %v1424
        %v1426 = vmul.f32 %v1421, 1.442695
        %v1427 = vpow.pop %v1426
        %v1428 = vmul.f32 %v1422, 1.442695
        %v1429 = vpow.pop %v1428
        %v1430 = vmul.f32 %v1423, 1.442695
        %v1431 = vpow.pop %v1430
        %v1432 = vsel %vm1199, %v1425, 0.0
        %1433 = vadd.xlane.f32.xlu0 %v1432
        %v1434 = vpop.xlane.xlu0 %1433
        %v1435 = vsel %vm1199, %v1427, 0.0
        %1436 = vadd.xlane.f32.xlu0 %v1435
        %v1437 = vpop.xlane.xlu0 %1436
        %v1438 = vsel %vm1199, %v1429, 0.0
        %1439 = vadd.xlane.f32.xlu0 %v1438
        %v1440 = vpop.xlane.xlu0 %1439
        %v1441 = vsel %vm1199, %v1431, 0.0
        %1442 = vadd.xlane.f32.xlu0 %v1441
        %v1443 = vpop.xlane.xlu0 %1442
        %v1444 = vrcp.pop %v1434
        %v1445 = vrcp.pop %v1437
        %v1446 = vrcp.pop %v1440
        %v1447 = vrcp.pop %v1443
        %v1448 = vmul.f32 %v1425, %v1444
        %v1449 = vmul.f32 %v1427, %v1445
        %v1450 = vmul.f32 %v1429, %v1446
        %v1451 = vmul.f32 %v1431, %v1447
        %v1452 = vpack.c.bf16 %v1448, %v1448
        %v1453 = vpack.c.bf16 %v1449, %v1449
        %v1454 = vpack.c.bf16 %v1450, %v1450
        %v1455 = vpack.c.bf16 %v1451, %v1451
        %v1457 = vsel %vm1199, %v1452, 0
        %vm1459 = vcmask 1043456
        %v1461 = vsel %vm1459, %v1195, 0
        %1463 = vmatprep.subr.bf16.mxu0 0
        %1464 = vmatpush1.bf16.msra.mxu0 %v1461
        %1465 = vmatprep.subr.bf16.mxu0 0
        %1466 = vmatpush1.bf16.msra.mxu0 0
        %1467 = vmatprep.subr.bf16.mxu0 0
        %1468 = vmatpush1.bf16.msra.mxu0 0
        %1469 = vmatprep.subr.bf16.mxu0 0
        %1470 = vmatpush1.bf16.msra.mxu0 0
        %1471 = vmatprep.subr.bf16.mxu0 0
        %1472 = vmatpush1.bf16.msra.mxu0 0
        %1473 = vmatprep.subr.bf16.mxu0 0
        %1474 = vmatpush1.bf16.msra.mxu0 0
        %1475 = vmatprep.subr.bf16.mxu0 0
        %1476 = vmatpush1.bf16.msra.mxu0 0
        %1477 = vmatprep.subr.bf16.mxu0 0
        %1478 = vmatpush1.bf16.msra.mxu0 0
        %1479 = vmatprep.subr.bf16.mxu0 0
        %1480 = vmatpush1.bf16.msra.mxu0 0
        %1481 = vmatprep.subr.bf16.mxu0 0
        %1482 = vmatpush1.bf16.msra.mxu0 0
        %1483 = vmatprep.subr.bf16.mxu0 0
        %1484 = vmatpush1.bf16.msra.mxu0 0
        %1485 = vmatprep.subr.bf16.mxu0 0
        %1486 = vmatpush1.bf16.msra.mxu0 0
        %1487 = vmatprep.subr.bf16.mxu0 0
        %1488 = vmatpush1.bf16.msra.mxu0 0
        %1489 = vmatprep.subr.bf16.mxu0 0
        %1490 = vmatpush1.bf16.msra.mxu0 0
        %1491 = vmatprep.subr.bf16.mxu0 0
        %1492 = vmatpush1.bf16.msra.mxu0 0
        %1493 = vmatprep.subr.bf16.mxu0 0
        %1494 = vmatpush1.bf16.msra.mxu0 0
        %1495 = vmatprep.mubr.bf16.mxu0 0
        %1496 = vmatmul.mubr.bf16.gmra.mrb[0].mxu0 %v1457
        %v1497 = vpop.f32.mrb[0].mxu0
        %v1498 = vadd.f32 0.0, %v1497
        %v1499 = vpop.f32.mrb[0].mxu0
        %v1500 = vpop.f32.mrb[0].mxu0
        %v1501 = vpop.f32.mrb[0].mxu0
        %1502 = vdwg.mxu0
        %v1504 = vsel %vm1199, %v1453, 0
        %v1507 = vsel %vm1459, %v1196, 0
        %1509 = vmatprep.subr.bf16.mxu0 0
        %1510 = vmatpush1.bf16.msra.mxu0 %v1507
        %1511 = vmatprep.subr.bf16.mxu0 0
        %1512 = vmatpush1.bf16.msra.mxu0 0
        %1513 = vmatprep.subr.bf16.mxu0 0
        %1514 = vmatpush1.bf16.msra.mxu0 0
        %1515 = vmatprep.subr.bf16.mxu0 0
        %1516 = vmatpush1.bf16.msra.mxu0 0
        %1517 = vmatprep.subr.bf16.mxu0 0
        %1518 = vmatpush1.bf16.msra.mxu0 0
        %1519 = vmatprep.subr.bf16.mxu0 0
        %1520 = vmatpush1.bf16.msra.mxu0 0
        %1521 = vmatprep.subr.bf16.mxu0 0
        %1522 = vmatpush1.bf16.msra.mxu0 0
        %1523 = vmatprep.subr.bf16.mxu0 0
        %1524 = vmatpush1.bf16.msra.mxu0 0
        %1525 = vmatprep.subr.bf16.mxu0 0
        %1526 = vmatpush1.bf16.msra.mxu0 0
        %1527 = vmatprep.subr.bf16.mxu0 0
        %1528 = vmatpush1.bf16.msra.mxu0 0
        %1529 = vmatprep.subr.bf16.mxu0 0
        %1530 = vmatpush1.bf16.msra.mxu0 0
        %1531 = vmatprep.subr.bf16.mxu0 0
        %1532 = vmatpush1.bf16.msra.mxu0 0
        %1533 = vmatprep.subr.bf16.mxu0 0
        %1534 = vmatpush1.bf16.msra.mxu0 0
        %1535 = vmatprep.subr.bf16.mxu0 0
        %1536 = vmatpush1.bf16.msra.mxu0 0
        %1537 = vmatprep.subr.bf16.mxu0 0
        %1538 = vmatpush1.bf16.msra.mxu0 0
        %1539 = vmatprep.subr.bf16.mxu0 0
        %1540 = vmatpush1.bf16.msra.mxu0 0
        %1541 = vmatprep.mubr.bf16.mxu0 0
        %1542 = vmatmul.mubr.bf16.gmra.mrb[0].mxu0 %v1504
        %v1543 = vpop.f32.mrb[0].mxu0
        %v1544 = vadd.f32 0.0, %v1543
        %v1545 = vpop.f32.mrb[0].mxu0
        %v1546 = vpop.f32.mrb[0].mxu0
        %v1547 = vpop.f32.mrb[0].mxu0
        %1548 = vdwg.mxu0
        %v1550 = vsel %vm1199, %v1454, 0
        %v1553 = vsel %vm1459, %v1197, 0
        %1555 = vmatprep.subr.bf16.mxu0 0
        %1556 = vmatpush1.bf16.msra.mxu0 %v1553
        %1557 = vmatprep.subr.bf16.mxu0 0
        %1558 = vmatpush1.bf16.msra.mxu0 0
        %1559 = vmatprep.subr.bf16.mxu0 0
        %1560 = vmatpush1.bf16.msra.mxu0 0
        %1561 = vmatprep.subr.bf16.mxu0 0
        %1562 = vmatpush1.bf16.msra.mxu0 0
        %1563 = vmatprep.subr.bf16.mxu0 0
        %1564 = vmatpush1.bf16.msra.mxu0 0
        %1565 = vmatprep.subr.bf16.mxu0 0
        %1566 = vmatpush1.bf16.msra.mxu0 0
        %1567 = vmatprep.subr.bf16.mxu0 0
        %1568 = vmatpush1.bf16.msra.mxu0 0
        %1569 = vmatprep.subr.bf16.mxu0 0
        %1570 = vmatpush1.bf16.msra.mxu0 0
        %1571 = vmatprep.subr.bf16.mxu0 0
        %1572 = vmatpush1.bf16.msra.mxu0 0
        %1573 = vmatprep.subr.bf16.mxu0 0
        %1574 = vmatpush1.bf16.msra.mxu0 0
        %1575 = vmatprep.subr.bf16.mxu0 0
        %1576 = vmatpush1.bf16.msra.mxu0 0
        %1577 = vmatprep.subr.bf16.mxu0 0
        %1578 = vmatpush1.bf16.msra.mxu0 0
        %1579 = vmatprep.subr.bf16.mxu0 0
        %1580 = vmatpush1.bf16.msra.mxu0 0
        %1581 = vmatprep.subr.bf16.mxu0 0
        %1582 = vmatpush1.bf16.msra.mxu0 0
        %1583 = vmatprep.subr.bf16.mxu0 0
        %1584 = vmatpush1.bf16.msra.mxu0 0
        %1585 = vmatprep.subr.bf16.mxu0 0
        %1586 = vmatpush1.bf16.msra.mxu0 0
        %1587 = vmatprep.mubr.bf16.mxu0 0
        %1588 = vmatmul.mubr.bf16.gmra.mrb[0].mxu0 %v1550
        %v1589 = vpop.f32.mrb[0].mxu0
        %v1590 = vadd.f32 0.0, %v1589
        %v1591 = vpop.f32.mrb[0].mxu0
        %v1592 = vpop.f32.mrb[0].mxu0
        %v1593 = vpop.f32.mrb[0].mxu0
        %1594 = vdwg.mxu0
        %v1596 = vsel %vm1199, %v1455, 0
        %v1599 = vsel %vm1459, %v1198, 0
        %1601 = vmatprep.subr.bf16.mxu0 0
        %1602 = vmatpush1.bf16.msra.mxu0 %v1599
        %1603 = vmatprep.subr.bf16.mxu0 0
        %1604 = vmatpush1.bf16.msra.mxu0 0
        %1605 = vmatprep.subr.bf16.mxu0 0
        %1606 = vmatpush1.bf16.msra.mxu0 0
        %1607 = vmatprep.subr.bf16.mxu0 0
        %1608 = vmatpush1.bf16.msra.mxu0 0
        %1609 = vmatprep.subr.bf16.mxu0 0
        %1610 = vmatpush1.bf16.msra.mxu0 0
        %1611 = vmatprep.subr.bf16.mxu0 0
        %1612 = vmatpush1.bf16.msra.mxu0 0
        %1613 = vmatprep.subr.bf16.mxu0 0
        %1614 = vmatpush1.bf16.msra.mxu0 0
        %1615 = vmatprep.subr.bf16.mxu0 0
        %1616 = vmatpush1.bf16.msra.mxu0 0
        %1617 = vmatprep.subr.bf16.mxu0 0
        %1618 = vmatpush1.bf16.msra.mxu0 0
        %1619 = vmatprep.subr.bf16.mxu0 0
        %1620 = vmatpush1.bf16.msra.mxu0 0
        %1621 = vmatprep.subr.bf16.mxu0 0
        %1622 = vmatpush1.bf16.msra.mxu0 0
        %1623 = vmatprep.subr.bf16.mxu0 0
        %1624 = vmatpush1.bf16.msra.mxu0 0
        %1625 = vmatprep.subr.bf16.mxu0 0
        %1626 = vmatpush1.bf16.msra.mxu0 0
        %1627 = vmatprep.subr.bf16.mxu0 0
        %1628 = vmatpush1.bf16.msra.mxu0 0
        %1629 = vmatprep.subr.bf16.mxu0 0
        %1630 = vmatpush1.bf16.msra.mxu0 0
        %1631 = vmatprep.subr.bf16.mxu0 0
        %1632 = vmatpush1.bf16.msra.mxu0 0
        %1633 = vmatprep.mubr.bf16.mxu0 0
        %1634 = vmatmul.mubr.bf16.gmra.mrb[0].mxu0 %v1596
        %v1635 = vpop.f32.mrb[0].mxu0
        %v1636 = vadd.f32 0.0, %v1635
        %v1637 = vpop.f32.mrb[0].mxu0
        %v1638 = vpop.f32.mrb[0].mxu0
        %v1639 = vpop.f32.mrb[0].mxu0
        %1640 = vdwg.mxu0
        %v1641 = vcombine.low %v1498, %v1590
        %v1642 = vcombine.high %v1498, %v1590
        %v1644 = vunpack.c.l.s4 1983009808
        %v1645 = vunpack.c.0.s8 %v1644
        %v1646 = vlaneseq
        %v1647 = vshrl.u32 %v1646, 7
        %v1648 = vsub.s32 %v1645, %v1647
        %v1649 = vrot.slane %v1641, %v1648
        %v1651 = vunpack.c.l.s4 1983009808
        %v1652 = vunpack.c.0.s8 %v1651
        %v1653 = vlaneseq
        %v1654 = vshrl.u32 %v1653, 7
        %v1655 = vsub.s32 %v1652, %v1654
        %v1656 = vrot.slane %v1642, %v1655
        %v1657 = vcombine.low %v1544, %v1636
        %v1658 = vcombine.high %v1544, %v1636
        %v1660 = vunpack.c.l.s4 1983009808
        %v1661 = vunpack.c.0.s8 %v1660
        %v1662 = vlaneseq
        %v1663 = vshrl.u32 %v1662, 7
        %v1664 = vsub.s32 %v1661, %v1663
        %v1665 = vrot.slane %v1657, %v1664
        %v1667 = vunpack.c.l.s4 1983009808
        %v1668 = vunpack.c.0.s8 %v1667
        %v1669 = vlaneseq
        %v1670 = vshrl.u32 %v1669, 7
        %v1671 = vsub.s32 %v1668, %v1670
        %v1672 = vrot.slane %v1658, %v1671
        %v1673 = vcombine.low %v1649, %v1665
        %v1674 = vcombine.high %v1649, %v1665
        %v1676 = vunpack.c.l.s4 1934713408
        %v1677 = vunpack.c.0.s8 %v1676
        %v1678 = vlaneseq
        %v1679 = vshrl.u32 %v1678, 7
        %v1680 = vsub.s32 %v1677, %v1679
        %v1681 = vrot.slane %v1673, %v1680
        %v1683 = vunpack.c.l.s4 1934713408
        %v1684 = vunpack.c.0.s8 %v1683
        %v1685 = vlaneseq
        %v1686 = vshrl.u32 %v1685, 7
        %v1687 = vsub.s32 %v1684, %v1686
        %v1688 = vrot.slane %v1674, %v1687
        %v1689 = vcombine.low %v1656, %v1672
        %v1690 = vcombine.high %v1656, %v1672
        %v1692 = vunpack.c.l.s4 1934713408
        %v1693 = vunpack.c.0.s8 %v1692
        %v1694 = vlaneseq
        %v1695 = vshrl.u32 %v1694, 7
        %v1696 = vsub.s32 %v1693, %v1695
        %v1697 = vrot.slane %v1689, %v1696
        %v1699 = vunpack.c.l.s4 1934713408
        %v1700 = vunpack.c.0.s8 %v1699
        %v1701 = vlaneseq
        %v1702 = vshrl.u32 %v1701, 7
        %v1703 = vsub.s32 %v1700, %v1702
        %v1704 = vrot.slane %v1690, %v1703
        %v1705 = vcombine.high %v1681, 0.0
        %v1706 = vcombine.high %v1688, 0.0
        %v1707 = vcombine.high %v1697, 0.0
        %v1708 = vcombine.high %v1704, 0.0
        %v1709 = vcombine.low %v1681, %v1688
        %v1711 = vunpack.c.l.s4 1983009808
        %v1712 = vunpack.c.0.s8 %v1711
        %v1713 = vlaneseq
        %v1714 = vshrl.u32 %v1713, 7
        %v1715 = vsub.s32 %v1712, %v1714
        %v1716 = vrot.slane %v1709, %v1715
        %v1717 = vcombine.low %v1705, %v1706
        %v1719 = vunpack.c.l.s4 1983009808
        %v1720 = vunpack.c.0.s8 %v1719
        %v1721 = vlaneseq
        %v1722 = vshrl.u32 %v1721, 7
        %v1723 = vsub.s32 %v1720, %v1722
        %v1724 = vrot.slane %v1717, %v1723
        %v1725 = vcombine.low %v1697, %v1704
        %v1727 = vunpack.c.l.s4 1983009808
        %v1728 = vunpack.c.0.s8 %v1727
        %v1729 = vlaneseq
        %v1730 = vshrl.u32 %v1729, 7
        %v1731 = vsub.s32 %v1728, %v1730
        %v1732 = vrot.slane %v1725, %v1731
        %v1733 = vcombine.low %v1707, %v1708
        %v1735 = vunpack.c.l.s4 1983009808
        %v1736 = vunpack.c.0.s8 %v1735
        %v1737 = vlaneseq
        %v1738 = vshrl.u32 %v1737, 7
        %v1739 = vsub.s32 %v1736, %v1738
        %v1740 = vrot.slane %v1733, %v1739
        %v1741 = vcombine.low %v1716, %v1724
        %v1742 = vcombine.high %v1716, %v1724
        %v1744 = vunpack.c.l.s4 1934713408
        %v1745 = vunpack.c.0.s8 %v1744
        %v1746 = vlaneseq
        %v1747 = vshrl.u32 %v1746, 7
        %v1748 = vsub.s32 %v1745, %v1747
        %v1749 = vrot.slane %v1741, %v1748
        %v1751 = vunpack.c.l.s4 1934713408
        %v1752 = vunpack.c.0.s8 %v1751
        %v1753 = vlaneseq
        %v1754 = vshrl.u32 %v1753, 7
        %v1755 = vsub.s32 %v1752, %v1754
        %v1756 = vrot.slane %v1742, %v1755
        %v1757 = vcombine.low %v1732, %v1740
        %v1758 = vcombine.high %v1732, %v1740
        %v1760 = vunpack.c.l.s4 1934713408
        %v1761 = vunpack.c.0.s8 %v1760
        %v1762 = vlaneseq
        %v1763 = vshrl.u32 %v1762, 7
        %v1764 = vsub.s32 %v1761, %v1763
        %v1765 = vrot.slane %v1757, %v1764
        %v1767 = vunpack.c.l.s4 1934713408
        %v1768 = vunpack.c.0.s8 %v1767
        %v1769 = vlaneseq
        %v1770 = vshrl.u32 %v1769, 7
        %v1771 = vsub.s32 %v1768, %v1770
        %v1772 = vrot.slane %v1758, %v1771
        %v1773 = vcombine.low %v1749, %v1765
        %v1774 = vcombine.high %v1749, %v1765
        %v1775 = vcombine.low %v1756, %v1772
        %v1776 = vcombine.high %v1756, %v1772
        %1778 = vrot.lane.b32.xlu0 %v1774, 8
        %v1779 = vpop.permute.xlu0 %1778
        %1782 = vrot.lane.b32.xlu0 %v1775, 16
        %v1783 = vpop.permute.xlu0 %1782
        %1786 = vrot.lane.b32.xlu0 %v1776, 24
        %v1787 = vpop.permute.xlu0 %1786
        %v1789 = vsel %vm1199, %v1773, %v1779
        %vm1790 = vcmask 130048
        %v1791 = vsel %vm1790, %v1789, %v1783
        %vm1792 = vcmask 195584
        %v1793 = vsel %vm1792, %v1791, %v1787
        %v1794 = vpack.c.bf16 %v1793, %v1793
        %v1795 = vld [vmem:[#allocation10] sm:$0xf]
        %v1796 = vld [vmem:[#allocation10 + $0x4] sm:$0xf]
        %v1797 = vld [vmem:[#allocation10 + $0x8] sm:$0xf]
        %v1798 = vld [vmem:[#allocation10 + $0xc] sm:$0xf]
        %v1799 = vld [vmem:[#allocation11] sm:$0x1]
        %v1801 = vlaneseq
        %v1802 = vshrl.u32 %v1801, 7
        %v1803 = vsub.s32 0, %v1802
        %v1804 = vrot.slane %v1799, %v1803
        %v1810 = vunpack.c.l.b16 %v1795
        %v1811 = vunpack.c.l.b16 %v1796
        %v1812 = vunpack.c.l.b16 %v1797
        %v1813 = vunpack.c.l.b16 %v1798
        %v1814 = vpack.c.b16 %v1811, %v1810
        %v1815 = vpack.c.b16 %v1813, %v1812
        %v1819 = vsel %vm701, %v1794, 0
        %1821 = vmatprep.subr.bf16.mxu0 0
        %1822 = vmatpush1.bf16.msra.mxu0 %v1814
        %1823 = vmatprep.subr.bf16.mxu0 0
        %1824 = vmatpush1.bf16.msra.mxu0 %v1815
        %1825 = vmatprep.subr.bf16.mxu0 0
        %1826 = vmatpush1.bf16.msra.mxu0 0
        %1827 = vmatprep.subr.bf16.mxu0 0
        %1828 = vmatpush1.bf16.msra.mxu0 0
        %1829 = vmatprep.subr.bf16.mxu0 0
        %1830 = vmatpush1.bf16.msra.mxu0 0
        %1831 = vmatprep.subr.bf16.mxu0 0
        %1832 = vmatpush1.bf16.msra.mxu0 0
        %1833 = vmatprep.subr.bf16.mxu0 0
        %1834 = vmatpush1.bf16.msra.mxu0 0
        %1835 = vmatprep.subr.bf16.mxu0 0
        %1836 = vmatpush1.bf16.msra.mxu0 0
        %1837 = vmatprep.subr.bf16.mxu0 0
        %1838 = vmatpush1.bf16.msra.mxu0 0
        %1839 = vmatprep.subr.bf16.mxu0 0
        %1840 = vmatpush1.bf16.msra.mxu0 0
        %1841 = vmatprep.subr.bf16.mxu0 0
        %1842 = vmatpush1.bf16.msra.mxu0 0
        %1843 = vmatprep.subr.bf16.mxu0 0
        %1844 = vmatpush1.bf16.msra.mxu0 0
        %1845 = vmatprep.subr.bf16.mxu0 0
        %1846 = vmatpush1.bf16.msra.mxu0 0
        %1847 = vmatprep.subr.bf16.mxu0 0
        %1848 = vmatpush1.bf16.msra.mxu0 0
        %1849 = vmatprep.subr.bf16.mxu0 0
        %1850 = vmatpush1.bf16.msra.mxu0 0
        %1851 = vmatprep.subr.bf16.mxu0 0
        %1852 = vmatpush1.bf16.msra.mxu0 0
        %1853 = vmatprep.mubr.bf16.mxu0 0
        %1854 = vmatmul.mubr.bf16.gmra.mrb[0].mxu0 %v1819
        %v1855 = vpop.f32.mrb[0].mxu0
        %v1856 = vadd.f32 %v1804, %v1855
        %v1857 = vpop.f32.mrb[0].mxu0
        %v1858 = vpop.f32.mrb[0].mxu0
        %v1859 = vpop.f32.mrb[0].mxu0
        %1860 = vdwg.mxu0
        %v1861 = vadd.f32 %v676, %v1856
        %v1862 = vld [vmem:[#allocation13] sm:$0x1]
        %v1863 = vld [vmem:[#allocation14] sm:$0x1]
        %v1864 = vsel %vm701, %v1861, 0.0
        %1865 = vadd.xlane.f32.xlu0 %v1864
        %v1866 = vpop.xlane.xlu0 %1865
        %v1867 = vrcp.pop 32.0
        %v1868 = vmul.f32 %v1866, %v1867
        %v1869 = vsub.f32 %v1861, %v1868
        %v1870 = vmul.f32 %v1869, %v1869
        %v1871 = vsel %vm701, %v1870, 0.0
        %1872 = vadd.xlane.f32.xlu0 %v1871
        %v1873 = vpop.xlane.xlu0 %1872
        %v1874 = vmul.f32 %v1873, %v1867
        %v1875 = vadd.f32 %v1874, 1e-05
        %v1876 = vrsqrt.pop %v1875
        %v1877 = vmul.f32 %v1869, %v1876
        %v1879 = vlaneseq
        %v1880 = vshrl.u32 %v1879, 7
        %v1881 = vsub.s32 0, %v1880
        %v1882 = vrot.slane %v1862, %v1881
        %v1884 = vmul.f32 %v1877, %v1882
        %v1886 = vlaneseq
        %v1887 = vshrl.u32 %v1886, 7
        %v1888 = vsub.s32 0, %v1887
        %v1889 = vrot.slane %v1863, %v1888
        %v1891 = vadd.f32 %v1884, %v1889
        %v1892 = vpack.c.bf16 %v1891, %v1891
        %v1893 = vld [vmem:[#allocation16] sm:$0xf]
        %v1894 = vld [vmem:[#allocation16 + $0x4] sm:$0xf]
        %v1895 = vld [vmem:[#allocation16 + $0x8] sm:$0xf]
        %v1896 = vld [vmem:[#allocation16 + $0xc] sm:$0xf]
        %v1897 = vld [vmem:[#allocation17] sm:$0x1]
        %v1899 = vlaneseq
        %v1900 = vshrl.u32 %v1899, 7
        %v1901 = vsub.s32 0, %v1900
        %v1902 = vrot.slane %v1897, %v1901
        %v1908 = vunpack.c.l.b16 %v1893
        %v1909 = vunpack.c.l.b16 %v1894
        %v1910 = vunpack.c.l.b16 %v1895
        %v1911 = vunpack.c.l.b16 %v1896
        %v1912 = vpack.c.b16 %v1909, %v1908
        %v1913 = vpack.c.b16 %v1911, %v1910
        %v1917 = vsel %vm701, %v1892, 0
        %1919 = vmatprep.subr.bf16.mxu0 0
        %1920 = vmatpush1.bf16.msra.mxu0 %v1912
        %1921 = vmatprep.subr.bf16.mxu0 0
        %1922 = vmatpush1.bf16.msra.mxu0 %v1913
        %1923 = vmatprep.subr.bf16.mxu0 0
        %1924 = vmatpush1.bf16.msra.mxu0 0
        %1925 = vmatprep.subr.bf16.mxu0 0
        %1926 = vmatpush1.bf16.msra.mxu0 0
        %1927 = vmatprep.subr.bf16.mxu0 0
        %1928 = vmatpush1.bf16.msra.mxu0 0
        %1929 = vmatprep.subr.bf16.mxu0 0
        %1930 = vmatpush1.bf16.msra.mxu0 0
        %1931 = vmatprep.subr.bf16.mxu0 0
        %1932 = vmatpush1.bf16.msra.mxu0 0
        %1933 = vmatprep.subr.bf16.mxu0 0
        %1934 = vmatpush1.bf16.msra.mxu0 0
        %1935 = vmatprep.subr.bf16.mxu0 0
        %1936 = vmatpush1.bf16.msra.mxu0 0
        %1937 = vmatprep.subr.bf16.mxu0 0
        %1938 = vmatpush1.bf16.msra.mxu0 0
        %1939 = vmatprep.subr.bf16.mxu0 0
        %1940 = vmatpush1.bf16.msra.mxu0 0
        %1941 = vmatprep.subr.bf16.mxu0 0
        %1942 = vmatpush1.bf16.msra.mxu0 0
        %1943 = vmatprep.subr.bf16.mxu0 0
        %1944 = vmatpush1.bf16.msra.mxu0 0
        %1945 = vmatprep.subr.bf16.mxu0 0
        %1946 = vmatpush1.bf16.msra.mxu0 0
        %1947 = vmatprep.subr.bf16.mxu0 0
        %1948 = vmatpush1.bf16.msra.mxu0 0
        %1949 = vmatprep.subr.bf16.mxu0 0
        %1950 = vmatpush1.bf16.msra.mxu0 0
        %1951 = vmatprep.mubr.bf16.mxu0 0
        %1952 = vmatmul.mubr.bf16.gmra.mrb[0].mxu0 %v1917
        %v1953 = vpop.f32.mrb[0].mxu0
        %v1954 = vadd.f32 %v1902, %v1953
        %v1955 = vpop.f32.mrb[0].mxu0
        %v1956 = vpop.f32.mrb[0].mxu0
        %v1957 = vpop.f32.mrb[0].mxu0
        %1958 = vdwg.mxu0
        %v1959 = vmul.f32 %v1954, 0.5
        %v1960 = vmul.f32 %v1954, 0.70710677
        %v1961 = vand.u32 2147483647, %v1960
        %v1962 = vmul.f32 %v1961, 0.3275911
        %v1963 = vadd.f32 %v1962, 1.0
        %v1964 = vrcp.pop %v1963
        %v1965 = vmul.f32 1.0, %v1964
        %v1966 = vmul.f32 %v1965, 1.0614054
        %v1967 = vadd.f32 %v1966, -1.4531521
        %v1968 = vmul.f32 %v1967, %v1965
        %v1969 = vadd.f32 %v1968, 1.4214138
        %v1970 = vmul.f32 %v1969, %v1965
        %v1971 = vadd.f32 %v1970, -0.28449672
        %v1972 = vmul.f32 %v1971, %v1965
        %v1973 = vadd.f32 %v1972, 0.2548296
        %v1974 = vmul.f32 %v1973, %v1965
        %v1975 = vsub.f32 0.0, %v1961
        %v1976 = vmul.f32 %v1975, %v1961
        %v1977 = vmul.f32 %v1976, 1.442695
        %v1978 = vpow.pop %v1977
        %v1979 = vmul.f32 %v1974, %v1978
        %v1980 = vsub.f32 1.0, %v1979
        %vm1981 = vcmp.ge.f32.partialorder %v1960, 0.0
        %v1982 = vsub.f32 0.0, %v1980
        %v1983 = vsel %vm1981, %v1980, %v1982
        %v1984 = vadd.f32 %v1983, 1.0
        %v1985 = vmul.f32 %v1959, %v1984
        %v1986 = vpack.c.bf16 %v1985, %v1985
        %v1987 = vld [vmem:[#allocation19] sm:$0xf]
        %v1988 = vld [vmem:[#allocation19 + $0x4] sm:$0xf]
        %v1989 = vld [vmem:[#allocation19 + $0x8] sm:$0xf]
        %v1990 = vld [vmem:[#allocation19 + $0xc] sm:$0xf]
        %v1991 = vld [vmem:[#allocation19 + $0x10] sm:$0xf]
        %v1992 = vld [vmem:[#allocation19 + $0x14] sm:$0xf]
        %v1993 = vld [vmem:[#allocation19 + $0x18] sm:$0xf]
        %v1994 = vld [vmem:[#allocation19 + $0x1c] sm:$0xf]
        %v1995 = vld [vmem:[#allocation19 + $0x20] sm:$0xf]
        %v1996 = vld [vmem:[#allocation19 + $0x24] sm:$0xf]
        %v1997 = vld [vmem:[#allocation19 + $0x28] sm:$0xf]
        %v1998 = vld [vmem:[#allocation19 + $0x2c] sm:$0xf]
        %v1999 = vld [vmem:[#allocation19 + $0x30] sm:$0xf]
        %v2000 = vld [vmem:[#allocation19 + $0x34] sm:$0xf]
        %v2001 = vld [vmem:[#allocation19 + $0x38] sm:$0xf]
        %v2002 = vld [vmem:[#allocation19 + $0x3c] sm:$0xf]
        %v2003 = vld [vmem:[#allocation20] sm:$0x1]
        %v2005 = vlaneseq
        %v2006 = vshrl.u32 %v2005, 7
        %v2007 = vsub.s32 0, %v2006
        %v2008 = vrot.slane %v2003, %v2007
        %v2026 = vunpack.c.l.b16 %v1987
        %v2027 = vunpack.c.l.b16 %v1988
        %v2028 = vunpack.c.l.b16 %v1989
        %v2029 = vunpack.c.l.b16 %v1990
        %v2030 = vunpack.c.l.b16 %v1991
        %v2031 = vunpack.c.l.b16 %v1992
        %v2032 = vunpack.c.l.b16 %v1993
        %v2033 = vunpack.c.l.b16 %v1994
        %v2034 = vunpack.c.l.b16 %v1995
        %v2035 = vunpack.c.l.b16 %v1996
        %v2036 = vunpack.c.l.b16 %v1997
        %v2037 = vunpack.c.l.b16 %v1998
        %v2038 = vunpack.c.l.b16 %v1999
        %v2039 = vunpack.c.l.b16 %v2000
        %v2040 = vunpack.c.l.b16 %v2001
        %v2041 = vunpack.c.l.b16 %v2002
        %v2042 = vpack.c.b16 %v2027, %v2026
        %v2043 = vpack.c.b16 %v2029, %v2028
        %v2044 = vpack.c.b16 %v2031, %v2030
        %v2045 = vpack.c.b16 %v2033, %v2032
        %v2046 = vpack.c.b16 %v2035, %v2034
        %v2047 = vpack.c.b16 %v2037, %v2036
        %v2048 = vpack.c.b16 %v2039, %v2038
        %v2049 = vpack.c.b16 %v2041, %v2040
        %2058 = vmatprep.subr.bf16.mxu0 0
        %2059 = vmatpush1.bf16.msra.mxu0 %v2042
        %2060 = vmatprep.subr.bf16.mxu0 0
        %2061 = vmatpush1.bf16.msra.mxu0 %v2043
        %2062 = vmatprep.subr.bf16.mxu0 0
        %2063 = vmatpush1.bf16.msra.mxu0 %v2044
        %2064 = vmatprep.subr.bf16.mxu0 0
        %2065 = vmatpush1.bf16.msra.mxu0 %v2045
        %2066 = vmatprep.subr.bf16.mxu0 0
        %2067 = vmatpush1.bf16.msra.mxu0 %v2046
        %2068 = vmatprep.subr.bf16.mxu0 0
        %2069 = vmatpush1.bf16.msra.mxu0 %v2047
        %2070 = vmatprep.subr.bf16.mxu0 0
        %2071 = vmatpush1.bf16.msra.mxu0 %v2048
        %2072 = vmatprep.subr.bf16.mxu0 0
        %2073 = vmatpush1.bf16.msra.mxu0 %v2049
        %2074 = vmatprep.subr.bf16.mxu0 0
        %2075 = vmatpush1.bf16.msra.mxu0 0
        %2076 = vmatprep.subr.bf16.mxu0 0
        %2077 = vmatpush1.bf16.msra.mxu0 0
        %2078 = vmatprep.subr.bf16.mxu0 0
        %2079 = vmatpush1.bf16.msra.mxu0 0
        %2080 = vmatprep.subr.bf16.mxu0 0
        %2081 = vmatpush1.bf16.msra.mxu0 0
        %2082 = vmatprep.subr.bf16.mxu0 0
        %2083 = vmatpush1.bf16.msra.mxu0 0
        %2084 = vmatprep.subr.bf16.mxu0 0
        %2085 = vmatpush1.bf16.msra.mxu0 0
        %2086 = vmatprep.subr.bf16.mxu0 0
        %2087 = vmatpush1.bf16.msra.mxu0 0
        %2088 = vmatprep.subr.bf16.mxu0 0
        %2089 = vmatpush1.bf16.msra.mxu0 0
        %2090 = vmatprep.mubr.bf16.mxu0 0
        %2091 = vmatmul.mubr.bf16.gmra.mrb[0].mxu0 %v1986
        %v2092 = vpop.f32.mrb[0].mxu0
        %v2093 = vadd.f32 %v2008, %v2092
        %v2094 = vpop.f32.mrb[0].mxu0
        %v2095 = vpop.f32.mrb[0].mxu0
        %v2096 = vpop.f32.mrb[0].mxu0
        %2097 = vdwg.mxu0
        %v2098 = vadd.f32 %v1891, %v2093
        %v2099 = vld [vmem:[#allocation22] sm:$0x1]
        %v2100 = vld [vmem:[#allocation23] sm:$0x1]
        %v2101 = vsel %vm701, %v2098, 0.0
        %2102 = vadd.xlane.f32.xlu0 %v2101
        %v2103 = vpop.xlane.xlu0 %2102
        %v2104 = vmul.f32 %v2103, %v1867
        %v2105 = vsub.f32 %v2098, %v2104
        %v2106 = vmul.f32 %v2105, %v2105
        %v2107 = vsel %vm701, %v2106, 0.0
        %2108 = vadd.xlane.f32.xlu0 %v2107
        %v2109 = vpop.xlane.xlu0 %2108
        %v2110 = vmul.f32 %v2109, %v1867
        %v2111 = vadd.f32 %v2110, 1e-05
        %v2112 = vrsqrt.pop %v2111
        %v2113 = vmul.f32 %v2105, %v2112
        %v2115 = vlaneseq
        %v2116 = vshrl.u32 %v2115, 7
        %v2117 = vsub.s32 0, %v2116
        %v2118 = vrot.slane %v2099, %v2117
        %v2120 = vmul.f32 %v2113, %v2118
        %v2122 = vlaneseq
        %v2123 = vshrl.u32 %v2122, 7
        %v2124 = vsub.s32 0, %v2123
        %v2125 = vrot.slane %v2100, %v2124
        %v2127 = vadd.f32 %v2120, %v2125
        %2128 = vst.msk [vmem:[%s674] sm:$0xff] %vm701, %v2127
        %s2129 = sand.u32 %s352, 1
        %s2130 = scalar_lea.sflag [#allocation4], %s2129
        %s2131 = sand.u32 %s352, 1
        %s2132 = smul.addr %s2131, 8
        %s2133 = scalar_lea.vmem [#allocation25], %s2132
        // Predicated region
        $region133: #{tpu_custom_call.1} parent=75 // pred_check
          %p2134 = pneg %p362
        $region134: #{tpu_custom_call.1} parent=75 // pred_check_branch
          %2136 = sbr.rel (%p2134) target = $region136
        $region135: #{tpu_custom_call.1} parent=75 // pred_region
          %s2138 = ssub.s32 128, 128
          %2139 = vsyncadd %s2130, %s2138
          %s2140 = smul.addr %s40, 128
          %s2141 = scalar_lea.hbm %s14, %s2140
          %s2143 = sshll.u32 %s2133, 4
          %s2144 = int_to_ptr.vmem [resolvable:$true] %s2143
          %2146 = dma.vmem_to_hbm [thread:$0]  %s2144, 128, %s2141, %s2130
        $region136: #{tpu_custom_call.1} parent=75 // pred_fallthru
          _
      $region76: #{tpu_custom_call.1} parent=5 // pred_fallthru
        _
      %p2147 = scmp.le.s32.totalorder 2, %s35
      // Predicated region
      $region137: #{tpu_custom_call.1} parent=5 // pred_check
        %p2148 = pneg %p2147
      $region138: #{tpu_custom_call.1} parent=5 // pred_check_branch
        %2150 = sbr.rel (%p2148) target = $region140
      $region139: #{tpu_custom_call.1} parent=5 // pred_region
        %s2151 = ssub.s32 %s35, 2
        // Predicated region
        $region141: #{tpu_custom_call.1} parent=139 // pred_check
          %p2152 = pneg %p368
        $region142: #{tpu_custom_call.1} parent=139 // pred_check_branch
          %2154 = sbr.rel (%p2152) target = $region144
        $region143: #{tpu_custom_call.1} parent=139 // pred_region
          %s2155 = sand.u32 %s353, 1
          %s2156 = scalar_lea.sflag [#allocation4], %s2155
          %s2157 = sand.u32 %s353, 1
          %s2158 = smul.addr %s2157, 8
          %s2159 = scalar_lea.vmem [#allocation25], %s2158
          %2160 = dma.done %s2156, 128
        $region144: #{tpu_custom_call.1} parent=139 // pred_fallthru
          _
      $region140: #{tpu_custom_call.1} parent=5 // pred_fallthru
        _
    $region6: #{tpu_custom_call.1} parent=1 // loop_footer
      %s39 = sadd.s32 1, %s35
    $region7: #{tpu_custom_call.1} parent=1 // loop_footer_branch
      %34 = sbr.rel target = $region3
    $region8: #{tpu_custom_call.1} parent=1 // loop_exit
      _
    %2161 = vsyncpa [#allocation3], 1
    %s2162 = scalar_lea.sflag [#allocation3], 1
    %2163 = vsyncpa %s2162, 1
    %2164 = vsyncpa [#allocation6], 1
    %s2165 = scalar_lea.sflag [#allocation6], 1
    %2166 = vsyncpa %s2165, 1
    %2167 = vsyncpa [#allocation9], 1
    %2168 = vsyncpa [#allocation12], 1
    %2169 = vsyncpa [#allocation15], 1
    %2170 = vsyncpa [#allocation18], 1
    %2171 = vsyncpa [#allocation21], 1
    %2172 = vsyncpa [#allocation24], 1
    %2173 = vsyncpa [#allocation4], 1
    %s2174 = scalar_lea.sflag [#allocation4], 1
    %2175 = vsyncpa %s2174, 1

</llo_original>
